<compile_context>
chip_gen: v7x
topology: tpu7x:2x2x1
jax: 0.10.0
libtpu: 0.0.40
codegen_flags: <defaults>
</compile_context>

<pallas_src>
import math

import jax
import jax.numpy as jnp
import numpy as np
from jax.experimental import pallas as pl
from jax.experimental.pallas import tpu as pltpu

# ----- module hyper-params (the torch `params` object) -----
V = (4, 16, 16)          # params.V   (img is (B,) + V, i.e. NCHW)
FV = math.prod(V)        # flattened visible size = 1024
E = 32                   # params.E
Z = E + 1                # params.Z = 33
EPS = 1e-2               # params.EPS
INNER_NSTEP = 4          # params.inner_nstep
INNER_LR = 0.5           # params.inner_lr (p_h_update == p_z_update)
NS = 8                   # params.inner_nsample
B = 2                    # batch
NSB = NS * B

F32 = jnp.float32
LOG_2PI = math.log(2.0 * math.pi)
LOG_NS = math.log(NS)
CLIP_EPS = float(np.finfo(np.float32).eps)   # torch probs_to_logits clamp

# ----- packed-parameter layout: ONE VMEM array, 8-aligned row blocks ---------
PW = Z                       # packed lane width (33)
R_G = 0                      # rows   0..31 : G = Wdec^T @ Wdec          (E,E)
R_WT = 32                    # rows  32..64 : Wwhz^T                     (Z,E)
R_W = 72                     # rows  72..103: Wwhz                       (E,Z)
R_BWHZ = 104                 # row  104     : bwhz                       (1,E)
R_BLP = 105                  # row  105     : blp                        (1,Z)
R_LSB = 106                  # row  106     : log(sigmoid(blp))          (1,Z)
R_SPB = 107                  # row  107     : softplus(blp)              (1,Z)
R_C0 = 108                   # rows 108..109: c0 = (x - bdec) @ Wdec     (B,E)
R_SC = 110                   # row  110     : [exp(2bso), exp(-2bso), norm_c]
R_XB2 = 111                  # row  111     : ||x_b - bdec||^2           (B,)
PAR_ROWS = 112

# ----- packed-uniforms layout: ONE VMEM array --------------------------------
U_RH = 0                     # rows  0..7  : rand_h (step-major, row i*B+b) (.,E)
U_RZ = 8                     # rows  8..15 : rand_z (step-major)            (.,Z)
U_UZ = 16                    # rows 16..31 : u_z    (batch-major, row b*NS+s)(.,Z)
U_UH = 32                    # rows 32..47 : u_h    (batch-major)           (.,E)
UNI_ROWS = 48


# ---------------------------------------------------------------------------
# Single fused gridless kernel: relaxation loop + importance-sampled ELBO.
# Everything is E/Z-sized; no FV-sized tensor ever exists in-kernel.
# ---------------------------------------------------------------------------
def _srbmgl2_kernel(par_ref, uni_ref, z_out_ref, loss_ref):
    # ---- unpack the single parameter pack (one DMA, loaded once) ----
    G = par_ref[R_G:R_G + E, 0:E]                      # (E,E)  Wdec^T Wdec
    WwhzT = par_ref[R_WT:R_WT + Z, 0:E]                # (Z,E)
    Wwhz = par_ref[R_W:R_W + E, 0:Z]                   # (E,Z)
    bwhz = par_ref[R_BWHZ:R_BWHZ + 1, 0:E]             # (1,E)
    blp = par_ref[R_BLP:R_BLP + 1, 0:Z]                # (1,Z)
    log_sig_blp = par_ref[R_LSB:R_LSB + 1, 0:Z]        # (1,Z) log(sigmoid(blp))
    softplus_blp = par_ref[R_SPB:R_SPB + 1, 0:Z]       # (1,Z)
    c0 = par_ref[R_C0:R_C0 + B, 0:E]                   # (B,E) (x - bdec) @ Wdec
    e2b = par_ref[R_SC:R_SC + 1, 0:1]                  # (1,1) exp(2*bso)
    em2b = par_ref[R_SC:R_SC + 1, 1:2]                 # (1,1) exp(-2*bso)
    nrm = par_ref[R_SC:R_SC + 1, 2:3]                  # (1,1) FV*(-bso - log2pi/2)

    # ---- mean-field relaxation loop (fully unrolled, 32x32 Gram form) ----
    node_h = jnp.full((B, E), EPS, F32)
    node_z = jnp.full((B, Z), EPS, F32)
    for i in range(INNER_NSTEP):
        # dh1 == ((x - (node_h @ Wdec^T + bdec)) * exp(2bso)) @ Wdec, reassociated
        dh1 = (c0 - jnp.dot(node_h, G, preferred_element_type=F32)) * e2b
        hp = jnp.dot(node_z, WwhzT, preferred_element_type=F32) + bwhz      # (B,E)
        dh2 = -jax.nn.softplus(-hp)                      # log(sigmoid(hp)), stable
        dz1 = jnp.dot(node_h * (1.0 - jax.nn.sigmoid(hp)), Wwhz,
                      preferred_element_type=F32) + log_sig_blp             # (B,Z)
        h_next = jax.nn.sigmoid(dh1 + dh2)
        z_next = jax.nn.sigmoid(dz1)
        # arr_random_update: sel = rand < p ; out = (~sel)*arr + sel*(next+arr)/2
        rh_i = uni_ref[U_RH + i * B:U_RH + (i + 1) * B, 0:E]
        rz_i = uni_ref[U_RZ + i * B:U_RZ + (i + 1) * B, 0:Z]
        node_h = jnp.where(rh_i < INNER_LR, (h_next + node_h) * 0.5, node_h)
        node_z = jnp.where(rz_i < INNER_LR, (z_next + node_z) * 0.5, node_z)
    z_out_ref[...] = node_z

    # ---- Bernoulli(node_z) log-prob pieces computed once on (B,Z) ----
    # clamp mirrors torch probs_to_logits and removes the log(0) = -inf hazard
    nz_c = jnp.clip(node_z, CLIP_EPS, 1.0 - CLIP_EPS)
    log_nz = jnp.log(nz_c)                               # (B,Z)
    log_1mnz = jnp.log1p(-nz_c)                          # (B,Z)

    # ---- NS-sample importance-weighted ELBO, one contiguous (NS,.) block per
    #      batch row (uniforms are packed batch-major) -> no replication at all
    lse_sum = jnp.zeros((1, 1), F32)
    for b in range(B):
        uz_b = uni_ref[U_UZ + b * NS:U_UZ + (b + 1) * NS, 0:Z]   # (NS,Z) aligned
        uh_b = uni_ref[U_UH + b * NS:U_UH + (b + 1) * NS, 0:E]   # (NS,E) aligned
        nz_b = node_z[b:b + 1, :]                                # (1,Z) broadcast

        # z ~ Bernoulli(node_z); h ~ Bernoulli(logits = whz(z))
        z = (uz_b < nz_b).astype(F32)                                        # (NS,Z)
        hl = jnp.dot(z, WwhzT, preferred_element_type=F32) + bwhz            # (NS,E)
        h = (uh_b < jax.nn.sigmoid(hl)).astype(F32)                          # (NS,E)

        # Normal(loc, exp(bso)).log_prob(x).sum(-1) via the Gram expansion:
        #   sum_f (x - loc)^2 = ||x-bdec||^2 - 2 h.c0_b + h G h^T
        hG = jnp.dot(h, G, preferred_element_type=F32)                       # (NS,E)
        xb2_b = par_ref[R_XB2:R_XB2 + 1, b:b + 1]                            # (1,1)
        sumsq = (xb2_b
                 - 2.0 * jnp.sum(h * c0[b:b + 1, :], axis=-1, keepdims=True)
                 + jnp.sum(h * hG, axis=-1, keepdims=True))                  # (NS,1)
        lp_ext = (-0.5) * em2b * sumsq + nrm                                 # (NS,1)

        # Bernoulli(logits=blp).log_prob(z) - Bernoulli(probs=node_z).log_prob(z)
        lp_prior = z * blp - softplus_blp                                    # (NS,Z)
        lp_post = jnp.where(z > 0.5, log_nz[b:b + 1, :], log_1mnz[b:b + 1, :])
        t = lp_ext + jnp.sum(lp_prior - lp_post, axis=-1, keepdims=True)     # (NS,1)

        # per-batch logsumexp over the NS contiguous sublanes (one exp push)
        m = jnp.max(t, axis=0, keepdims=True)                                # (1,1)
        s = jnp.sum(jnp.exp(t - m), axis=0, keepdims=True)                   # (1,1)
        lse_sum = lse_sum + m + jnp.log(s)

    # loss = -mean_b(logsumexp_b - log NS)
    loss_ref[...] = LOG_NS - lse_sum * (1.0 / B)


# ---------------------------------------------------------------------------
# Wrapper: Gram/hoisted precompute + packing (all tiny), then one pallas_call.
# ---------------------------------------------------------------------------
@jax.jit
def srbmgl2_loss(img, Wdec, bdec, Wwhz, bwhz, blp, bso, rand_h, rand_z, u_z, u_h):
    img_flat = img.reshape(B, FV).astype(F32)
    bso_s = bso.reshape(()).astype(F32)
    blp_r = blp.reshape(1, Z).astype(F32)

    # Gram restructure: kernel never sees Wdec / bdec / img.
    G = Wdec.T @ Wdec                                   # (E,E)
    xb = img_flat - bdec.reshape(1, FV)                 # (B,FV)
    c0 = xb @ Wdec                                      # (B,E)
    xb2 = jnp.sum(xb * xb, axis=-1)                     # (B,)
    e2b = jnp.exp(2.0 * bso_s)
    em2b = jnp.exp(-2.0 * bso_s)
    nrm = (-bso_s - 0.5 * LOG_2PI) * FV                 # Normal const * FV
    log_sig_blp = -jax.nn.softplus(-blp_r)              # log(sigmoid(blp))
    softplus_blp = jax.nn.softplus(blp_r)

    par = jnp.zeros((PAR_ROWS, PW), F32)
    par = par.at[R_G:R_G + E, :E].set(G)
    par = par.at[R_WT:R_WT + Z, :E].set(Wwhz.T)
    par = par.at[R_W:R_W + E, :Z].set(Wwhz)
    par = par.at[R_BWHZ, :E].set(bwhz.reshape(E))
    par = par.at[R_BLP, :Z].set(blp.reshape(Z))
    par = par.at[R_LSB, :Z].set(log_sig_blp.reshape(Z))
    par = par.at[R_SPB, :Z].set(softplus_blp.reshape(Z))
    par = par.at[R_C0:R_C0 + B, :E].set(c0)
    par = par.at[R_SC, 0:3].set(jnp.stack([e2b, em2b, nrm]))
    par = par.at[R_XB2, 0:B].set(xb2)

    uni = jnp.zeros((UNI_ROWS, PW), F32)
    uni = uni.at[U_RH:U_RH + INNER_NSTEP * B, :E].set(
        rand_h.reshape(INNER_NSTEP * B, E))
    uni = uni.at[U_RZ:U_RZ + INNER_NSTEP * B, :Z].set(
        rand_z.reshape(INNER_NSTEP * B, Z))
    # batch-major (row = b*NS + s) so each batch row's NS samples are contiguous
    uni = uni.at[U_UZ:U_UZ + NSB, :Z].set(u_z.transpose(1, 0, 2).reshape(NSB, Z))
    uni = uni.at[U_UH:U_UH + NSB, :E].set(u_h.transpose(1, 0, 2).reshape(NSB, E))

    vmem = pltpu.MemorySpace.VMEM
    return pl.pallas_call(
        _srbmgl2_kernel,
        out_shape=(jax.ShapeDtypeStruct((B, Z), F32),
                   jax.ShapeDtypeStruct((1, 1), F32)),
        in_specs=[pl.BlockSpec(memory_space=vmem),
                  pl.BlockSpec(memory_space=vmem)],
        out_specs=(pl.BlockSpec(memory_space=vmem),
                   pl.BlockSpec(memory_space=vmem)),
    )(par, uni)


# ---------------------------------------------------------------------------
# Pure-JAX references in the ORIGINAL (non-Gram) formulation.
# ---------------------------------------------------------------------------
def ref_inner_loop(img_flat, Wdec, bdec, Wwhz, bwhz, blp, bso, rand_h, rand_z):
    node_h = jnp.full((B, E), EPS, F32)
    node_z = jnp.full((B, Z), EPS, F32)
    for i in range(INNER_NSTEP):
        node_e = node_h @ Wdec.T + bdec
        dh1 = ((img_flat - node_e) * jnp.exp(2.0 * bso)) @ Wdec
        node_h_post = node_z @ Wwhz.T + bwhz
        sig = jax.nn.sigmoid(node_h_post)
        dh2 = jnp.log(sig)
        dz1 = (node_h * (1.0 - sig)) @ Wwhz + jnp.log(jax.nn.sigmoid(blp))
        h_next = jax.nn.sigmoid(dh1 + dh2)
        z_next = jax.nn.sigmoid(dz1)
        node_h = jnp.where(rand_h[i] < INNER_LR, (h_next + node_h) * 0.5, node_h)
        node_z = jnp.where(rand_z[i] < INNER_LR, (z_next + node_z) * 0.5, node_z)
    return node_z


def ref_loss(node_z, img_flat, Wdec, bdec, Wwhz, bwhz, blp, bso, u_z, u_h):
    z = (u_z < node_z[None]).astype(F32)                          # (NS, B, Z)
    h_logit = jnp.einsum('sbz,ez->sbe', z, Wwhz) + bwhz           # whz(z)
    h = (u_h < jax.nn.sigmoid(h_logit)).astype(F32)
    loc = jnp.einsum('sbe,fe->sbf', h, Wdec) + bdec               # w_dec(h)
    lp_ext = -0.5 * ((img_flat[None] - loc) * jnp.exp(-bso)) ** 2 - bso - 0.5 * LOG_2PI
    lp_prior = z * blp - jax.nn.softplus(blp)
    nz_c = jnp.clip(node_z, CLIP_EPS, 1.0 - CLIP_EPS)
    lp_post = jnp.where(z > 0.5, jnp.log(nz_c)[None], jnp.log1p(-nz_c)[None])
    t = lp_ext.sum(-1) + (lp_prior - lp_post).sum(-1)             # (NS, B)
    lse = jax.scipy.special.logsumexp(t, axis=0) - math.log(NS)   # (B,)
    return -jnp.mean(lse)


if __name__ == "__main__":
    key = jax.random.PRNGKey(0)
    ks = jax.random.split(key, 10)

    # data + deterministic parameter init (shapes from the module's __init__)
    img = jax.random.normal(ks[0], (B,) + V, dtype=F32)            # NCHW
    Wdec = 0.05 * jax.random.normal(ks[1], (FV, E), dtype=F32)     # w_dec.weight
    bdec = 0.05 * jax.random.normal(ks[2], (FV,), dtype=F32)       # w_dec.bias
    Wwhz = 0.10 * jax.random.normal(ks[3], (E, Z), dtype=F32)      # whz.weight
    bwhz = 0.10 * jax.random.normal(ks[4], (E,), dtype=F32)        # whz.bias
    blp = 0.10 * jax.random.normal(ks[5], (Z,), dtype=F32)         # b_loc_prior
    bso = jnp.zeros((1, 1), dtype=F32)                             # b_scale_out
    # (b_scale_prior / b_scale_post are unused in loss_joint_lp)

    # TODO(synk): torch samples Bernoulli/rand internally; here deterministic
    # JAX uniforms are generated in glue and thresholded inside the kernel.
    rand_h = jax.random.uniform(ks[6], (INNER_NSTEP, B, E), dtype=F32)
    rand_z = jax.random.uniform(ks[7], (INNER_NSTEP, B, Z), dtype=F32)
    u_z = jax.random.uniform(ks[8], (NS, B, Z), dtype=F32)
    u_h = jax.random.uniform(ks[9], (NS, B, E), dtype=F32)

    node_z, loss = srbmgl2_loss(img, Wdec, bdec, Wwhz, bwhz, blp, bso,
                                rand_h, rand_z, u_z, u_h)
    jax.block_until_ready(loss)

    img_flat = img.reshape(B, FV)
    bdec2 = bdec.reshape(1, FV)
    bwhz2 = bwhz.reshape(1, E)
    blp2 = blp.reshape(1, Z)

    # correctness check: relaxation loop vs pure-JAX reference (Gram reassoc.)
    node_z_ref = ref_inner_loop(img_flat, Wdec, bdec2, Wwhz, bwhz2, blp2, bso,
                                rand_h, rand_z)
    np.testing.assert_allclose(np.asarray(node_z), np.asarray(node_z_ref),
                               rtol=2e-3, atol=2e-3)

    # correctness check: ELBO tail vs pure-JAX reference (same node_z so the
    # Bernoulli threshold decisions are identical)
    loss_ref = ref_loss(node_z, img_flat, Wdec, bdec2, Wwhz, bwhz2, blp2, bso,
                        u_z, u_h)
    assert np.isfinite(float(np.asarray(loss).reshape(())))
    np.testing.assert_allclose(np.asarray(loss).reshape(()),
                               np.asarray(loss_ref), rtol=5e-3, atol=0.5)

    print("KERNEL_OK")
</pallas_src>

<mosaic_0001>
module attributes {stable_mosaic.version = 11 : i64} {
  func.func @_srbmgl2_kernel(%arg0: memref<112x33xf32, #tpu.memory_space<vmem>>, %arg1: memref<48x33xf32, #tpu.memory_space<vmem>>, %arg2: memref<2x33xf32, #tpu.memory_space<vmem>>, %arg3: memref<1x1xf32, #tpu.memory_space<vmem>>) attributes {dimension_semantics = [], scalar_prefetch = 0 : i64, scratch_operands = 0 : i64, tpu.core_type = #tpu.core_type<tc>} {
    %c0 = arith.constant 0 : index
    %c0_0 = arith.constant 0 : index
    %0 = vector.load %arg0[%c0, %c0_0] : memref<112x33xf32, #tpu.memory_space<vmem>>, vector<32x32xf32>
    %c32 = arith.constant 32 : index
    %c0_1 = arith.constant 0 : index
    %1 = vector.load %arg0[%c32, %c0_1] : memref<112x33xf32, #tpu.memory_space<vmem>>, vector<33x32xf32>
    %c72 = arith.constant 72 : index
    %c0_2 = arith.constant 0 : index
    %2 = vector.load %arg0[%c72, %c0_2] : memref<112x33xf32, #tpu.memory_space<vmem>>, vector<32x33xf32>
    %c104 = arith.constant 104 : index
    %c0_3 = arith.constant 0 : index
    %3 = vector.load %arg0[%c104, %c0_3] : memref<112x33xf32, #tpu.memory_space<vmem>>, vector<1x32xf32>
    %c105 = arith.constant 105 : index
    %c0_4 = arith.constant 0 : index
    %4 = vector.load %arg0[%c105, %c0_4] : memref<112x33xf32, #tpu.memory_space<vmem>>, vector<1x33xf32>
    %c106 = arith.constant 106 : index
    %c0_5 = arith.constant 0 : index
    %5 = vector.load %arg0[%c106, %c0_5] : memref<112x33xf32, #tpu.memory_space<vmem>>, vector<1x33xf32>
    %c107 = arith.constant 107 : index
    %c0_6 = arith.constant 0 : index
    %6 = vector.load %arg0[%c107, %c0_6] : memref<112x33xf32, #tpu.memory_space<vmem>>, vector<1x33xf32>
    %c108 = arith.constant 108 : index
    %c0_7 = arith.constant 0 : index
    %7 = vector.load %arg0[%c108, %c0_7] : memref<112x33xf32, #tpu.memory_space<vmem>>, vector<2x32xf32>
    %c110 = arith.constant 110 : index
    %c0_8 = arith.constant 0 : index
    %8 = vector.load %arg0[%c110, %c0_8] : memref<112x33xf32, #tpu.memory_space<vmem>>, vector<1x1xf32>
    %c110_9 = arith.constant 110 : index
    %c1 = arith.constant 1 : index
    %9 = vector.load %arg0[%c110_9, %c1] : memref<112x33xf32, #tpu.memory_space<vmem>>, vector<1x1xf32>
    %c110_10 = arith.constant 110 : index
    %c2 = arith.constant 2 : index
    %10 = vector.load %arg0[%c110_10, %c2] : memref<112x33xf32, #tpu.memory_space<vmem>>, vector<1x1xf32>
    %cst = arith.constant 0.00999999977 : f32
    %11 = vector.broadcast %cst : f32 to vector<2x32xf32>
    %cst_11 = arith.constant 0.00999999977 : f32
    %12 = vector.broadcast %cst_11 : f32 to vector<2x33xf32>
    %cst_12 = arith.constant dense<0.000000e+00> : vector<2x32xf32>
    %13 = tpu.matmul %11, %0, %cst_12 {dimension_numbers = #tpu.dot_dimension_numbers<[1], [0], [0], [1], [0, 0, 1, 1], [], []>} : vector<2x32xf32>, vector<32x32xf32>, vector<2x32xf32> -> vector<2x32xf32>
    %14 = arith.subf %7, %13 : vector<2x32xf32>
    %15 = vector.broadcast %8 : vector<1x1xf32> to vector<2x32xf32>
    %16 = arith.mulf %14, %15 : vector<2x32xf32>
    %cst_13 = arith.constant dense<0.000000e+00> : vector<2x32xf32>
    %17 = tpu.matmul %12, %1, %cst_13 {dimension_numbers = #tpu.dot_dimension_numbers<[1], [0], [0], [1], [0, 0, 1, 1], [], []>} : vector<2x33xf32>, vector<33x32xf32>, vector<2x32xf32> -> vector<2x32xf32>
    %18 = vector.broadcast %3 : vector<1x32xf32> to vector<2x32xf32>
    %19 = arith.addf %17, %18 : vector<2x32xf32>
    %cst_14 = arith.constant 0.000000e+00 : f32
    %20 = vector.broadcast %cst_14 : f32 to vector<2x32xf32>
    %21 = arith.subf %20, %19 : vector<2x32xf32>
    %cst_15 = arith.constant 0.000000e+00 : f32
    %22 = vector.broadcast %cst_15 : f32 to vector<2x32xf32>
    %23 = arith.maximumf %21, %22 : vector<2x32xf32>
    %24 = vector.broadcast %cst_15 : f32 to vector<2x32xf32>
    %25 = arith.subf %21, %24 : vector<2x32xf32>
    %26 = arith.cmpf one, %25, %25 : vector<2x32xf32>
    %27 = vector.broadcast %cst_15 : f32 to vector<2x32xf32>
    %28 = arith.addf %21, %27 : vector<2x32xf32>
    %29 = math.absf %25 : vector<2x32xf32>
    %cst_16 = arith.constant 0.000000e+00 : f32
    %30 = vector.broadcast %cst_16 : f32 to vector<2x32xf32>
    %31 = arith.subf %30, %29 : vector<2x32xf32>
    %32 = math.exp %31 : vector<2x32xf32>
    %33 = math.log1p %32 : vector<2x32xf32>
    %34 = arith.addf %23, %33 : vector<2x32xf32>
    %35 = arith.select %26, %28, %34 : vector<2x32xi1>, vector<2x32xf32>
    %cst_17 = arith.constant 0.000000e+00 : f32
    %36 = vector.broadcast %cst_17 : f32 to vector<2x32xf32>
    %37 = arith.subf %36, %35 : vector<2x32xf32>
    %38 = arith.negf %19 : vector<2x32xf32>
    %39 = math.exp %38 : vector<2x32xf32>
    %cst_18 = arith.constant 1.000000e+00 : f32
    %40 = vector.broadcast %cst_18 : f32 to vector<2x32xf32>
    %41 = arith.addf %40, %39 : vector<2x32xf32>
    %42 = arith.divf %40, %41 : vector<2x32xf32>
    %cst_19 = arith.constant 1.000000e+00 : f32
    %43 = vector.broadcast %cst_19 : f32 to vector<2x32xf32>
    %44 = arith.subf %43, %42 : vector<2x32xf32>
    %45 = arith.mulf %11, %44 : vector<2x32xf32>
    %cst_20 = arith.constant dense<0.000000e+00> : vector<2x33xf32>
    %46 = tpu.matmul %45, %2, %cst_20 {dimension_numbers = #tpu.dot_dimension_numbers<[1], [0], [0], [1], [0, 0, 1, 1], [], []>} : vector<2x32xf32>, vector<32x33xf32>, vector<2x33xf32> -> vector<2x33xf32>
    %47 = vector.broadcast %5 : vector<1x33xf32> to vector<2x33xf32>
    %48 = arith.addf %46, %47 : vector<2x33xf32>
    %49 = arith.addf %16, %37 : vector<2x32xf32>
    %50 = arith.negf %49 : vector<2x32xf32>
    %51 = math.exp %50 : vector<2x32xf32>
    %cst_21 = arith.constant 1.000000e+00 : f32
    %52 = vector.broadcast %cst_21 : f32 to vector<2x32xf32>
    %53 = arith.addf %52, %51 : vector<2x32xf32>
    %54 = arith.divf %52, %53 : vector<2x32xf32>
    %55 = arith.negf %48 : vector<2x33xf32>
    %56 = math.exp %55 : vector<2x33xf32>
    %cst_22 = arith.constant 1.000000e+00 : f32
    %57 = vector.broadcast %cst_22 : f32 to vector<2x33xf32>
    %58 = arith.addf %57, %56 : vector<2x33xf32>
    %59 = arith.divf %57, %58 : vector<2x33xf32>
    %c0_23 = arith.constant 0 : index
    %c0_24 = arith.constant 0 : index
    %60 = vector.load %arg1[%c0_23, %c0_24] : memref<48x33xf32, #tpu.memory_space<vmem>>, vector<2x32xf32>
    %c8 = arith.constant 8 : index
    %c0_25 = arith.constant 0 : index
    %61 = vector.load %arg1[%c8, %c0_25] : memref<48x33xf32, #tpu.memory_space<vmem>>, vector<2x33xf32>
    %cst_26 = arith.constant 5.000000e-01 : f32
    %62 = vector.broadcast %cst_26 : f32 to vector<2x32xf32>
    %63 = arith.cmpf olt, %60, %62 : vector<2x32xf32>
    %64 = arith.addf %54, %11 : vector<2x32xf32>
    %cst_27 = arith.constant 5.000000e-01 : f32
    %65 = vector.broadcast %cst_27 : f32 to vector<2x32xf32>
    %66 = arith.mulf %64, %65 : vector<2x32xf32>
    %67 = arith.select %63, %66, %11 : vector<2x32xi1>, vector<2x32xf32>
    %cst_28 = arith.constant 5.000000e-01 : f32
    %68 = vector.broadcast %cst_28 : f32 to vector<2x33xf32>
    %69 = arith.cmpf olt, %61, %68 : vector<2x33xf32>
    %70 = arith.addf %59, %12 : vector<2x33xf32>
    %cst_29 = arith.constant 5.000000e-01 : f32
    %71 = vector.broadcast %cst_29 : f32 to vector<2x33xf32>
    %72 = arith.mulf %70, %71 : vector<2x33xf32>
    %73 = arith.select %69, %72, %12 : vector<2x33xi1>, vector<2x33xf32>
    %cst_30 = arith.constant dense<0.000000e+00> : vector<2x32xf32>
    %74 = tpu.matmul %67, %0, %cst_30 {dimension_numbers = #tpu.dot_dimension_numbers<[1], [0], [0], [1], [0, 0, 1, 1], [], []>} : vector<2x32xf32>, vector<32x32xf32>, vector<2x32xf32> -> vector<2x32xf32>
    %75 = arith.subf %7, %74 : vector<2x32xf32>
    %76 = vector.broadcast %8 : vector<1x1xf32> to vector<2x32xf32>
    %77 = arith.mulf %75, %76 : vector<2x32xf32>
    %cst_31 = arith.constant dense<0.000000e+00> : vector<2x32xf32>
    %78 = tpu.matmul %73, %1, %cst_31 {dimension_numbers = #tpu.dot_dimension_numbers<[1], [0], [0], [1], [0, 0, 1, 1], [], []>} : vector<2x33xf32>, vector<33x32xf32>, vector<2x32xf32> -> vector<2x32xf32>
    %79 = vector.broadcast %3 : vector<1x32xf32> to vector<2x32xf32>
    %80 = arith.addf %78, %79 : vector<2x32xf32>
    %cst_32 = arith.constant 0.000000e+00 : f32
    %81 = vector.broadcast %cst_32 : f32 to vector<2x32xf32>
    %82 = arith.subf %81, %80 : vector<2x32xf32>
    %cst_33 = arith.constant 0.000000e+00 : f32
    %83 = vector.broadcast %cst_33 : f32 to vector<2x32xf32>
    %84 = arith.maximumf %82, %83 : vector<2x32xf32>
    %85 = vector.broadcast %cst_33 : f32 to vector<2x32xf32>
    %86 = arith.subf %82, %85 : vector<2x32xf32>
    %87 = arith.cmpf one, %86, %86 : vector<2x32xf32>
    %88 = vector.broadcast %cst_33 : f32 to vector<2x32xf32>
    %89 = arith.addf %82, %88 : vector<2x32xf32>
    %90 = math.absf %86 : vector<2x32xf32>
    %cst_34 = arith.constant 0.000000e+00 : f32
    %91 = vector.broadcast %cst_34 : f32 to vector<2x32xf32>
    %92 = arith.subf %91, %90 : vector<2x32xf32>
    %93 = math.exp %92 : vector<2x32xf32>
    %94 = math.log1p %93 : vector<2x32xf32>
    %95 = arith.addf %84, %94 : vector<2x32xf32>
    %96 = arith.select %87, %89, %95 : vector<2x32xi1>, vector<2x32xf32>
    %cst_35 = arith.constant 0.000000e+00 : f32
    %97 = vector.broadcast %cst_35 : f32 to vector<2x32xf32>
    %98 = arith.subf %97, %96 : vector<2x32xf32>
    %99 = arith.negf %80 : vector<2x32xf32>
    %100 = math.exp %99 : vector<2x32xf32>
    %cst_36 = arith.constant 1.000000e+00 : f32
    %101 = vector.broadcast %cst_36 : f32 to vector<2x32xf32>
    %102 = arith.addf %101, %100 : vector<2x32xf32>
    %103 = arith.divf %101, %102 : vector<2x32xf32>
    %cst_37 = arith.constant 1.000000e+00 : f32
    %104 = vector.broadcast %cst_37 : f32 to vector<2x32xf32>
    %105 = arith.subf %104, %103 : vector<2x32xf32>
    %106 = arith.mulf %67, %105 : vector<2x32xf32>
    %cst_38 = arith.constant dense<0.000000e+00> : vector<2x33xf32>
    %107 = tpu.matmul %106, %2, %cst_38 {dimension_numbers = #tpu.dot_dimension_numbers<[1], [0], [0], [1], [0, 0, 1, 1], [], []>} : vector<2x32xf32>, vector<32x33xf32>, vector<2x33xf32> -> vector<2x33xf32>
    %108 = vector.broadcast %5 : vector<1x33xf32> to vector<2x33xf32>
    %109 = arith.addf %107, %108 : vector<2x33xf32>
    %110 = arith.addf %77, %98 : vector<2x32xf32>
    %111 = arith.negf %110 : vector<2x32xf32>
    %112 = math.exp %111 : vector<2x32xf32>
    %cst_39 = arith.constant 1.000000e+00 : f32
    %113 = vector.broadcast %cst_39 : f32 to vector<2x32xf32>
    %114 = arith.addf %113, %112 : vector<2x32xf32>
    %115 = arith.divf %113, %114 : vector<2x32xf32>
    %116 = arith.negf %109 : vector<2x33xf32>
    %117 = math.exp %116 : vector<2x33xf32>
    %cst_40 = arith.constant 1.000000e+00 : f32
    %118 = vector.broadcast %cst_40 : f32 to vector<2x33xf32>
    %119 = arith.addf %118, %117 : vector<2x33xf32>
    %120 = arith.divf %118, %119 : vector<2x33xf32>
    %c2_41 = arith.constant 2 : index
    %c0_42 = arith.constant 0 : index
    %121 = vector.load %arg1[%c2_41, %c0_42] : memref<48x33xf32, #tpu.memory_space<vmem>>, vector<2x32xf32>
    %c10 = arith.constant 10 : index
    %c0_43 = arith.constant 0 : index
    %122 = vector.load %arg1[%c10, %c0_43] : memref<48x33xf32, #tpu.memory_space<vmem>>, vector<2x33xf32>
    %cst_44 = arith.constant 5.000000e-01 : f32
    %123 = vector.broadcast %cst_44 : f32 to vector<2x32xf32>
    %124 = arith.cmpf olt, %121, %123 : vector<2x32xf32>
    %125 = arith.addf %115, %67 : vector<2x32xf32>
    %cst_45 = arith.constant 5.000000e-01 : f32
    %126 = vector.broadcast %cst_45 : f32 to vector<2x32xf32>
    %127 = arith.mulf %125, %126 : vector<2x32xf32>
    %128 = arith.select %124, %127, %67 : vector<2x32xi1>, vector<2x32xf32>
    %cst_46 = arith.constant 5.000000e-01 : f32
    %129 = vector.broadcast %cst_46 : f32 to vector<2x33xf32>
    %130 = arith.cmpf olt, %122, %129 : vector<2x33xf32>
    %131 = arith.addf %120, %73 : vector<2x33xf32>
    %cst_47 = arith.constant 5.000000e-01 : f32
    %132 = vector.broadcast %cst_47 : f32 to vector<2x33xf32>
    %133 = arith.mulf %131, %132 : vector<2x33xf32>
    %134 = arith.select %130, %133, %73 : vector<2x33xi1>, vector<2x33xf32>
    %cst_48 = arith.constant dense<0.000000e+00> : vector<2x32xf32>
    %135 = tpu.matmul %128, %0, %cst_48 {dimension_numbers = #tpu.dot_dimension_numbers<[1], [0], [0], [1], [0, 0, 1, 1], [], []>} : vector<2x32xf32>, vector<32x32xf32>, vector<2x32xf32> -> vector<2x32xf32>
    %136 = arith.subf %7, %135 : vector<2x32xf32>
    %137 = vector.broadcast %8 : vector<1x1xf32> to vector<2x32xf32>
    %138 = arith.mulf %136, %137 : vector<2x32xf32>
    %cst_49 = arith.constant dense<0.000000e+00> : vector<2x32xf32>
    %139 = tpu.matmul %134, %1, %cst_49 {dimension_numbers = #tpu.dot_dimension_numbers<[1], [0], [0], [1], [0, 0, 1, 1], [], []>} : vector<2x33xf32>, vector<33x32xf32>, vector<2x32xf32> -> vector<2x32xf32>
    %140 = vector.broadcast %3 : vector<1x32xf32> to vector<2x32xf32>
    %141 = arith.addf %139, %140 : vector<2x32xf32>
    %cst_50 = arith.constant 0.000000e+00 : f32
    %142 = vector.broadcast %cst_50 : f32 to vector<2x32xf32>
    %143 = arith.subf %142, %141 : vector<2x32xf32>
    %cst_51 = arith.constant 0.000000e+00 : f32
    %144 = vector.broadcast %cst_51 : f32 to vector<2x32xf32>
    %145 = arith.maximumf %143, %144 : vector<2x32xf32>
    %146 = vector.broadcast %cst_51 : f32 to vector<2x32xf32>
    %147 = arith.subf %143, %146 : vector<2x32xf32>
    %148 = arith.cmpf one, %147, %147 : vector<2x32xf32>
    %149 = vector.broadcast %cst_51 : f32 to vector<2x32xf32>
    %150 = arith.addf %143, %149 : vector<2x32xf32>
    %151 = math.absf %147 : vector<2x32xf32>
    %cst_52 = arith.constant 0.000000e+00 : f32
    %152 = vector.broadcast %cst_52 : f32 to vector<2x32xf32>
    %153 = arith.subf %152, %151 : vector<2x32xf32>
    %154 = math.exp %153 : vector<2x32xf32>
    %155 = math.log1p %154 : vector<2x32xf32>
    %156 = arith.addf %145, %155 : vector<2x32xf32>
    %157 = arith.select %148, %150, %156 : vector<2x32xi1>, vector<2x32xf32>
    %cst_53 = arith.constant 0.000000e+00 : f32
    %158 = vector.broadcast %cst_53 : f32 to vector<2x32xf32>
    %159 = arith.subf %158, %157 : vector<2x32xf32>
    %160 = arith.negf %141 : vector<2x32xf32>
    %161 = math.exp %160 : vector<2x32xf32>
    %cst_54 = arith.constant 1.000000e+00 : f32
    %162 = vector.broadcast %cst_54 : f32 to vector<2x32xf32>
    %163 = arith.addf %162, %161 : vector<2x32xf32>
    %164 = arith.divf %162, %163 : vector<2x32xf32>
    %cst_55 = arith.constant 1.000000e+00 : f32
    %165 = vector.broadcast %cst_55 : f32 to vector<2x32xf32>
    %166 = arith.subf %165, %164 : vector<2x32xf32>
    %167 = arith.mulf %128, %166 : vector<2x32xf32>
    %cst_56 = arith.constant dense<0.000000e+00> : vector<2x33xf32>
    %168 = tpu.matmul %167, %2, %cst_56 {dimension_numbers = #tpu.dot_dimension_numbers<[1], [0], [0], [1], [0, 0, 1, 1], [], []>} : vector<2x32xf32>, vector<32x33xf32>, vector<2x33xf32> -> vector<2x33xf32>
    %169 = vector.broadcast %5 : vector<1x33xf32> to vector<2x33xf32>
    %170 = arith.addf %168, %169 : vector<2x33xf32>
    %171 = arith.addf %138, %159 : vector<2x32xf32>
    %172 = arith.negf %171 : vector<2x32xf32>
    %173 = math.exp %172 : vector<2x32xf32>
    %cst_57 = arith.constant 1.000000e+00 : f32
    %174 = vector.broadcast %cst_57 : f32 to vector<2x32xf32>
    %175 = arith.addf %174, %173 : vector<2x32xf32>
    %176 = arith.divf %174, %175 : vector<2x32xf32>
    %177 = arith.negf %170 : vector<2x33xf32>
    %178 = math.exp %177 : vector<2x33xf32>
    %cst_58 = arith.constant 1.000000e+00 : f32
    %179 = vector.broadcast %cst_58 : f32 to vector<2x33xf32>
    %180 = arith.addf %179, %178 : vector<2x33xf32>
    %181 = arith.divf %179, %180 : vector<2x33xf32>
    %c4 = arith.constant 4 : index
    %c0_59 = arith.constant 0 : index
    %182 = vector.load %arg1[%c4, %c0_59] : memref<48x33xf32, #tpu.memory_space<vmem>>, vector<2x32xf32>
    %c12 = arith.constant 12 : index
    %c0_60 = arith.constant 0 : index
    %183 = vector.load %arg1[%c12, %c0_60] : memref<48x33xf32, #tpu.memory_space<vmem>>, vector<2x33xf32>
    %cst_61 = arith.constant 5.000000e-01 : f32
    %184 = vector.broadcast %cst_61 : f32 to vector<2x32xf32>
    %185 = arith.cmpf olt, %182, %184 : vector<2x32xf32>
    %186 = arith.addf %176, %128 : vector<2x32xf32>
    %cst_62 = arith.constant 5.000000e-01 : f32
    %187 = vector.broadcast %cst_62 : f32 to vector<2x32xf32>
    %188 = arith.mulf %186, %187 : vector<2x32xf32>
    %189 = arith.select %185, %188, %128 : vector<2x32xi1>, vector<2x32xf32>
    %cst_63 = arith.constant 5.000000e-01 : f32
    %190 = vector.broadcast %cst_63 : f32 to vector<2x33xf32>
    %191 = arith.cmpf olt, %183, %190 : vector<2x33xf32>
    %192 = arith.addf %181, %134 : vector<2x33xf32>
    %cst_64 = arith.constant 5.000000e-01 : f32
    %193 = vector.broadcast %cst_64 : f32 to vector<2x33xf32>
    %194 = arith.mulf %192, %193 : vector<2x33xf32>
    %195 = arith.select %191, %194, %134 : vector<2x33xi1>, vector<2x33xf32>
    %cst_65 = arith.constant dense<0.000000e+00> : vector<2x32xf32>
    %196 = tpu.matmul %195, %1, %cst_65 {dimension_numbers = #tpu.dot_dimension_numbers<[1], [0], [0], [1], [0, 0, 1, 1], [], []>} : vector<2x33xf32>, vector<33x32xf32>, vector<2x32xf32> -> vector<2x32xf32>
    %197 = vector.broadcast %3 : vector<1x32xf32> to vector<2x32xf32>
    %198 = arith.addf %196, %197 : vector<2x32xf32>
    %199 = arith.negf %198 : vector<2x32xf32>
    %200 = math.exp %199 : vector<2x32xf32>
    %cst_66 = arith.constant 1.000000e+00 : f32
    %201 = vector.broadcast %cst_66 : f32 to vector<2x32xf32>
    %202 = arith.addf %201, %200 : vector<2x32xf32>
    %203 = arith.divf %201, %202 : vector<2x32xf32>
    %cst_67 = arith.constant 1.000000e+00 : f32
    %204 = vector.broadcast %cst_67 : f32 to vector<2x32xf32>
    %205 = arith.subf %204, %203 : vector<2x32xf32>
    %206 = arith.mulf %189, %205 : vector<2x32xf32>
    %cst_68 = arith.constant dense<0.000000e+00> : vector<2x33xf32>
    %207 = tpu.matmul %206, %2, %cst_68 {dimension_numbers = #tpu.dot_dimension_numbers<[1], [0], [0], [1], [0, 0, 1, 1], [], []>} : vector<2x32xf32>, vector<32x33xf32>, vector<2x33xf32> -> vector<2x33xf32>
    %208 = vector.broadcast %5 : vector<1x33xf32> to vector<2x33xf32>
    %209 = arith.addf %207, %208 : vector<2x33xf32>
    %210 = arith.negf %209 : vector<2x33xf32>
    %211 = math.exp %210 : vector<2x33xf32>
    %cst_69 = arith.constant 1.000000e+00 : f32
    %212 = vector.broadcast %cst_69 : f32 to vector<2x33xf32>
    %213 = arith.addf %212, %211 : vector<2x33xf32>
    %214 = arith.divf %212, %213 : vector<2x33xf32>
    %c14 = arith.constant 14 : index
    %c0_70 = arith.constant 0 : index
    %215 = vector.load %arg1[%c14, %c0_70] : memref<48x33xf32, #tpu.memory_space<vmem>>, vector<2x33xf32>
    %cst_71 = arith.constant 5.000000e-01 : f32
    %216 = vector.broadcast %cst_71 : f32 to vector<2x33xf32>
    %217 = arith.cmpf olt, %215, %216 : vector<2x33xf32>
    %218 = arith.addf %214, %195 : vector<2x33xf32>
    %cst_72 = arith.constant 5.000000e-01 : f32
    %219 = vector.broadcast %cst_72 : f32 to vector<2x33xf32>
    %220 = arith.mulf %218, %219 : vector<2x33xf32>
    %221 = arith.select %217, %220, %195 : vector<2x33xi1>, vector<2x33xf32>
    %c0_73 = arith.constant 0 : index
    %c0_74 = arith.constant 0 : index
    %222 = vector.load %arg2[%c0_73, %c0_74] : memref<2x33xf32, #tpu.memory_space<vmem>>, vector<2x33xf32>
    tpu.vector_store %arg2[%c0_73, %c0_74], %221 {strides = array<i32>} : memref<2x33xf32, #tpu.memory_space<vmem>>, vector<2x33xf32>,
    %cst_75 = arith.constant 1.1920929E-7 : f32
    %cst_76 = arith.constant 0.99999988 : f32
    %223 = vector.broadcast %cst_75 : f32 to vector<2x33xf32>
    %224 = arith.maximumf %223, %221 : vector<2x33xf32>
    %225 = vector.broadcast %cst_76 : f32 to vector<2x33xf32>
    %226 = arith.minimumf %225, %224 : vector<2x33xf32>
    %227 = math.log %226 : vector<2x33xf32>
    %cst_77 = arith.constant 0.000000e+00 : f32
    %228 = vector.broadcast %cst_77 : f32 to vector<2x33xf32>
    %229 = arith.subf %228, %226 : vector<2x33xf32>
    %230 = math.log1p %229 : vector<2x33xf32>
    %cst_78 = arith.constant 0.000000e+00 : f32
    %231 = vector.broadcast %cst_78 : f32 to vector<1x1xf32>
    %c16 = arith.constant 16 : index
    %c0_79 = arith.constant 0 : index
    %232 = vector.load %arg1[%c16, %c0_79] : memref<48x33xf32, #tpu.memory_space<vmem>>, vector<8x33xf32>
    %c32_80 = arith.constant 32 : index
    %c0_81 = arith.constant 0 : index
    %233 = vector.load %arg1[%c32_80, %c0_81] : memref<48x33xf32, #tpu.memory_space<vmem>>, vector<8x32xf32>
    %234 = vector.extract_strided_slice %221 {offsets = [0, 0], sizes = [1, 33], strides = [1, 1]} : vector<2x33xf32> to vector<1x33xf32>
    %235 = vector.broadcast %234 : vector<1x33xf32> to vector<8x33xf32>
    %236 = arith.cmpf olt, %232, %235 : vector<8x33xf32>
    %237 = arith.extui %236 : vector<8x33xi1> to vector<8x33xi32>
    %238 = arith.sitofp %237 : vector<8x33xi32> to vector<8x33xf32>
    %cst_82 = arith.constant dense<0.000000e+00> : vector<8x32xf32>
    %239 = tpu.matmul %238, %1, %cst_82 {dimension_numbers = #tpu.dot_dimension_numbers<[1], [0], [0], [1], [0, 0, 1, 1], [], []>} : vector<8x33xf32>, vector<33x32xf32>, vector<8x32xf32> -> vector<8x32xf32>
    %240 = vector.broadcast %3 : vector<1x32xf32> to vector<8x32xf32>
    %241 = arith.addf %239, %240 : vector<8x32xf32>
    %242 = arith.negf %241 : vector<8x32xf32>
    %243 = math.exp %242 : vector<8x32xf32>
    %cst_83 = arith.constant 1.000000e+00 : f32
    %244 = vector.broadcast %cst_83 : f32 to vector<8x32xf32>
    %245 = arith.addf %244, %243 : vector<8x32xf32>
    %246 = arith.divf %244, %245 : vector<8x32xf32>
    %247 = arith.cmpf olt, %233, %246 : vector<8x32xf32>
    %248 = arith.extui %247 : vector<8x32xi1> to vector<8x32xi32>
    %249 = arith.sitofp %248 : vector<8x32xi32> to vector<8x32xf32>
    %cst_84 = arith.constant dense<0.000000e+00> : vector<8x32xf32>
    %250 = tpu.matmul %249, %0, %cst_84 {dimension_numbers = #tpu.dot_dimension_numbers<[1], [0], [0], [1], [0, 0, 1, 1], [], []>} : vector<8x32xf32>, vector<32x32xf32>, vector<8x32xf32> -> vector<8x32xf32>
    %c111 = arith.constant 111 : index
    %c0_85 = arith.constant 0 : index
    %251 = vector.load %arg0[%c111, %c0_85] : memref<112x33xf32, #tpu.memory_space<vmem>>, vector<1x1xf32>
    %252 = vector.extract_strided_slice %7 {offsets = [0, 0], sizes = [1, 32], strides = [1, 1]} : vector<2x32xf32> to vector<1x32xf32>
    %253 = vector.broadcast %252 : vector<1x32xf32> to vector<8x32xf32>
    %254 = arith.mulf %249, %253 : vector<8x32xf32>
    %cst_86 = arith.constant dense<0.000000e+00> : vector<8xf32>
    %255 = vector.multi_reduction <add>, %254, %cst_86 [1] : vector<8x32xf32> to vector<8xf32>
    %256 = vector.shape_cast %255 : vector<8xf32> to vector<8x1xf32>
    %cst_87 = arith.constant 2.000000e+00 : f32
    %257 = vector.broadcast %cst_87 : f32 to vector<8x1xf32>
    %258 = arith.mulf %257, %256 : vector<8x1xf32>
    %259 = vector.broadcast %251 : vector<1x1xf32> to vector<8x1xf32>
    %260 = arith.subf %259, %258 : vector<8x1xf32>
    %261 = arith.mulf %249, %250 : vector<8x32xf32>
    %cst_88 = arith.constant dense<0.000000e+00> : vector<8xf32>
    %262 = vector.multi_reduction <add>, %261, %cst_88 [1] : vector<8x32xf32> to vector<8xf32>
    %263 = vector.shape_cast %262 : vector<8xf32> to vector<8x1xf32>
    %264 = arith.addf %260, %263 : vector<8x1xf32>
    %cst_89 = arith.constant -5.000000e-01 : f32
    %265 = vector.broadcast %cst_89 : f32 to vector<1x1xf32>
    %266 = arith.mulf %265, %9 : vector<1x1xf32>
    %267 = vector.broadcast %266 : vector<1x1xf32> to vector<8x1xf32>
    %268 = arith.mulf %267, %264 : vector<8x1xf32>
    %269 = vector.broadcast %10 : vector<1x1xf32> to vector<8x1xf32>
    %270 = arith.addf %268, %269 : vector<8x1xf32>
    %271 = vector.broadcast %4 : vector<1x33xf32> to vector<8x33xf32>
    %272 = arith.mulf %238, %271 : vector<8x33xf32>
    %273 = vector.broadcast %6 : vector<1x33xf32> to vector<8x33xf32>
    %274 = arith.subf %272, %273 : vector<8x33xf32>
    %cst_90 = arith.constant 5.000000e-01 : f32
    %275 = vector.broadcast %cst_90 : f32 to vector<8x33xf32>
    %276 = arith.cmpf ogt, %238, %275 : vector<8x33xf32>
    %277 = vector.extract_strided_slice %227 {offsets = [0, 0], sizes = [1, 33], strides = [1, 1]} : vector<2x33xf32> to vector<1x33xf32>
    %278 = vector.extract_strided_slice %230 {offsets = [0, 0], sizes = [1, 33], strides = [1, 1]} : vector<2x33xf32> to vector<1x33xf32>
    %279 = vector.shape_cast %277 : vector<1x33xf32> to vector<1x33xf32>
    %280 = vector.broadcast %279 : vector<1x33xf32> to vector<8x33xf32>
    %281 = vector.shape_cast %278 : vector<1x33xf32> to vector<1x33xf32>
    %282 = vector.broadcast %281 : vector<1x33xf32> to vector<8x33xf32>
    %283 = arith.select %276, %280, %282 : vector<8x33xi1>, vector<8x33xf32>
    %284 = arith.subf %274, %283 : vector<8x33xf32>
    %cst_91 = arith.constant dense<0.000000e+00> : vector<8xf32>
    %285 = vector.multi_reduction <add>, %284, %cst_91 [1] : vector<8x33xf32> to vector<8xf32>
    %286 = vector.shape_cast %285 : vector<8xf32> to vector<8x1xf32>
    %287 = arith.addf %270, %286 : vector<8x1xf32>
    %cst_92 = arith.constant dense<0xFF800000> : vector<1xf32>
    %288 = vector.multi_reduction <maximumf>, %287, %cst_92 [0] : vector<8x1xf32> to vector<1xf32>
    %289 = vector.shape_cast %288 : vector<1xf32> to vector<1x1xf32>
    %290 = vector.broadcast %289 : vector<1x1xf32> to vector<8x1xf32>
    %291 = arith.subf %287, %290 : vector<8x1xf32>
    %292 = math.exp %291 : vector<8x1xf32>
    %cst_93 = arith.constant dense<0.000000e+00> : vector<1xf32>
    %293 = vector.multi_reduction <add>, %292, %cst_93 [0] : vector<8x1xf32> to vector<1xf32>
    %294 = vector.shape_cast %293 : vector<1xf32> to vector<1x1xf32>
    %295 = arith.addf %231, %289 : vector<1x1xf32>
    %296 = math.log %294 : vector<1x1xf32>
    %297 = arith.addf %295, %296 : vector<1x1xf32>
    %c24 = arith.constant 24 : index
    %c0_94 = arith.constant 0 : index
    %298 = vector.load %arg1[%c24, %c0_94] : memref<48x33xf32, #tpu.memory_space<vmem>>, vector<8x33xf32>
    %c40 = arith.constant 40 : index
    %c0_95 = arith.constant 0 : index
    %299 = vector.load %arg1[%c40, %c0_95] : memref<48x33xf32, #tpu.memory_space<vmem>>, vector<8x32xf32>
    %300 = vector.extract_strided_slice %221 {offsets = [1, 0], sizes = [1, 33], strides = [1, 1]} : vector<2x33xf32> to vector<1x33xf32>
    %301 = vector.broadcast %300 : vector<1x33xf32> to vector<8x33xf32>
    %302 = arith.cmpf olt, %298, %301 : vector<8x33xf32>
    %303 = arith.extui %302 : vector<8x33xi1> to vector<8x33xi32>
    %304 = arith.sitofp %303 : vector<8x33xi32> to vector<8x33xf32>
    %cst_96 = arith.constant dense<0.000000e+00> : vector<8x32xf32>
    %305 = tpu.matmul %304, %1, %cst_96 {dimension_numbers = #tpu.dot_dimension_numbers<[1], [0], [0], [1], [0, 0, 1, 1], [], []>} : vector<8x33xf32>, vector<33x32xf32>, vector<8x32xf32> -> vector<8x32xf32>
    %306 = vector.broadcast %3 : vector<1x32xf32> to vector<8x32xf32>
    %307 = arith.addf %305, %306 : vector<8x32xf32>
    %308 = arith.negf %307 : vector<8x32xf32>
    %309 = math.exp %308 : vector<8x32xf32>
    %cst_97 = arith.constant 1.000000e+00 : f32
    %310 = vector.broadcast %cst_97 : f32 to vector<8x32xf32>
    %311 = arith.addf %310, %309 : vector<8x32xf32>
    %312 = arith.divf %310, %311 : vector<8x32xf32>
    %313 = arith.cmpf olt, %299, %312 : vector<8x32xf32>
    %314 = arith.extui %313 : vector<8x32xi1> to vector<8x32xi32>
    %315 = arith.sitofp %314 : vector<8x32xi32> to vector<8x32xf32>
    %cst_98 = arith.constant dense<0.000000e+00> : vector<8x32xf32>
    %316 = tpu.matmul %315, %0, %cst_98 {dimension_numbers = #tpu.dot_dimension_numbers<[1], [0], [0], [1], [0, 0, 1, 1], [], []>} : vector<8x32xf32>, vector<32x32xf32>, vector<8x32xf32> -> vector<8x32xf32>
    %c111_99 = arith.constant 111 : index
    %c1_100 = arith.constant 1 : index
    %317 = vector.load %arg0[%c111_99, %c1_100] : memref<112x33xf32, #tpu.memory_space<vmem>>, vector<1x1xf32>
    %318 = vector.extract_strided_slice %7 {offsets = [1, 0], sizes = [1, 32], strides = [1, 1]} : vector<2x32xf32> to vector<1x32xf32>
    %319 = vector.broadcast %318 : vector<1x32xf32> to vector<8x32xf32>
    %320 = arith.mulf %315, %319 : vector<8x32xf32>
    %cst_101 = arith.constant dense<0.000000e+00> : vector<8xf32>
    %321 = vector.multi_reduction <add>, %320, %cst_101 [1] : vector<8x32xf32> to vector<8xf32>
    %322 = vector.shape_cast %321 : vector<8xf32> to vector<8x1xf32>
    %cst_102 = arith.constant 2.000000e+00 : f32
    %323 = vector.broadcast %cst_102 : f32 to vector<8x1xf32>
    %324 = arith.mulf %323, %322 : vector<8x1xf32>
    %325 = vector.broadcast %317 : vector<1x1xf32> to vector<8x1xf32>
    %326 = arith.subf %325, %324 : vector<8x1xf32>
    %327 = arith.mulf %315, %316 : vector<8x32xf32>
    %cst_103 = arith.constant dense<0.000000e+00> : vector<8xf32>
    %328 = vector.multi_reduction <add>, %327, %cst_103 [1] : vector<8x32xf32> to vector<8xf32>
    %329 = vector.shape_cast %328 : vector<8xf32> to vector<8x1xf32>
    %330 = arith.addf %326, %329 : vector<8x1xf32>
    %cst_104 = arith.constant -5.000000e-01 : f32
    %331 = vector.broadcast %cst_104 : f32 to vector<1x1xf32>
    %332 = arith.mulf %331, %9 : vector<1x1xf32>
    %333 = vector.broadcast %332 : vector<1x1xf32> to vector<8x1xf32>
    %334 = arith.mulf %333, %330 : vector<8x1xf32>
    %335 = vector.broadcast %10 : vector<1x1xf32> to vector<8x1xf32>
    %336 = arith.addf %334, %335 : vector<8x1xf32>
    %337 = vector.broadcast %4 : vector<1x33xf32> to vector<8x33xf32>
    %338 = arith.mulf %304, %337 : vector<8x33xf32>
    %339 = vector.broadcast %6 : vector<1x33xf32> to vector<8x33xf32>
    %340 = arith.subf %338, %339 : vector<8x33xf32>
    %cst_105 = arith.constant 5.000000e-01 : f32
    %341 = vector.broadcast %cst_105 : f32 to vector<8x33xf32>
    %342 = arith.cmpf ogt, %304, %341 : vector<8x33xf32>
    %343 = vector.extract_strided_slice %227 {offsets = [1, 0], sizes = [1, 33], strides = [1, 1]} : vector<2x33xf32> to vector<1x33xf32>
    %344 = vector.extract_strided_slice %230 {offsets = [1, 0], sizes = [1, 33], strides = [1, 1]} : vector<2x33xf32> to vector<1x33xf32>
    %345 = vector.shape_cast %343 : vector<1x33xf32> to vector<1x33xf32>
    %346 = vector.broadcast %345 : vector<1x33xf32> to vector<8x33xf32>
    %347 = vector.shape_cast %344 : vector<1x33xf32> to vector<1x33xf32>
    %348 = vector.broadcast %347 : vector<1x33xf32> to vector<8x33xf32>
    %349 = arith.select %342, %346, %348 : vector<8x33xi1>, vector<8x33xf32>
    %350 = arith.subf %340, %349 : vector<8x33xf32>
    %cst_106 = arith.constant dense<0.000000e+00> : vector<8xf32>
    %351 = vector.multi_reduction <add>, %350, %cst_106 [1] : vector<8x33xf32> to vector<8xf32>
    %352 = vector.shape_cast %351 : vector<8xf32> to vector<8x1xf32>
    %353 = arith.addf %336, %352 : vector<8x1xf32>
    %cst_107 = arith.constant dense<0xFF800000> : vector<1xf32>
    %354 = vector.multi_reduction <maximumf>, %353, %cst_107 [0] : vector<8x1xf32> to vector<1xf32>
    %355 = vector.shape_cast %354 : vector<1xf32> to vector<1x1xf32>
    %356 = vector.broadcast %355 : vector<1x1xf32> to vector<8x1xf32>
    %357 = arith.subf %353, %356 : vector<8x1xf32>
    %358 = math.exp %357 : vector<8x1xf32>
    %cst_108 = arith.constant dense<0.000000e+00> : vector<1xf32>
    %359 = vector.multi_reduction <add>, %358, %cst_108 [0] : vector<8x1xf32> to vector<1xf32>
    %360 = vector.shape_cast %359 : vector<1xf32> to vector<1x1xf32>
    %361 = arith.addf %297, %355 : vector<1x1xf32>
    %362 = math.log %360 : vector<1x1xf32>
    %363 = arith.addf %361, %362 : vector<1x1xf32>
    %cst_109 = arith.constant 5.000000e-01 : f32
    %364 = vector.broadcast %cst_109 : f32 to vector<1x1xf32>
    %365 = arith.mulf %363, %364 : vector<1x1xf32>
    %cst_110 = arith.constant 2.07944155 : f32
    %366 = vector.broadcast %cst_110 : f32 to vector<1x1xf32>
    %367 = arith.subf %366, %365 : vector<1x1xf32>
    %c0_111 = arith.constant 0 : index
    %c0_112 = arith.constant 0 : index
    %368 = vector.load %arg3[%c0_111, %c0_112] : memref<1x1xf32, #tpu.memory_space<vmem>>, vector<1x1xf32>
    tpu.vector_store %arg3[%c0_111, %c0_112], %367 {strides = array<i32>} : memref<1x1xf32, #tpu.memory_space<vmem>>, vector<1x1xf32>,
    return
  }
}

</mosaic_0001>

<llo_original>
// kernel: srbmgl2_loss.1
$region0: #{srbmgl2_loss.1}
  #allocation0 [shape = 'u32[]', space=smem, size = 0x4, offset = 0x4, fixed_abs, tag = 'smem constant byte address 0x4 - core index']
  #allocation1 [shape = 'u32[144,128]{1,0:T(1,128)}', space=vmem, size = 0x12000, scoped, tag = 'internal scratch']
  %s0 = inlined_call_operand.vmem [shape: f32[112,33], index: 0, kind: input, shape index: {}]
  %s1 = inlined_call_operand.vmem [shape: f32[48,33], index: 1, kind: input, shape index: {}]
  %s2 = inlined_call_operand.hbm [shape: f32[2,33], index: 2, kind: output, shape index: {0}]
  %s3 = inlined_call_operand.hbm [shape: f32[1,1], index: 3, kind: output, shape index: {1}]
  %4 = xla_tuple %s2, %s3
  %s5 = sld [smem:[#allocation0]]
  $region26: #{srbmgl2_loss.1} parent=0
    _
  %s7 = ssub.s32 1, %s5
  %s8 = scalar_select 0, %s7, %s5
  $region1: #{srbmgl2_loss.1} parent=0
    #allocation2 [shape = 'u8[1024]{0}', space=vmem, size = 0x400, scoped, tag = 'output window, operand 0, single buffered']
    #allocation3 [shape = 's32[1]{0}', space=sflag, size = 0x4, scoped, tag = 'scoped memory for srbmgl2_loss.1']
    #allocation4 [shape = 'u8[512]{0}', space=vmem, size = 0x400, scoped, tag = 'output window, operand 1, single buffered']
    #allocation5 [shape = 's32[1]{0}', space=sflag, size = 0x4, scoped, tag = 'scoped memory for srbmgl2_loss.1']
    %9 = vsyncpa [#allocation3], 0
    %10 = vsyncpa [#allocation5], 0
    // Predicated region
    $region2: #{srbmgl2_loss.1} parent=1 // pred_check
      _
    $region3: #{srbmgl2_loss.1} parent=1 // pred_check_branch
      %12 = sbr.rel (0) target = $region5
    $region4: #{srbmgl2_loss.1} parent=1 // pred_region
      _
    $region5: #{srbmgl2_loss.1} parent=1 // pred_fallthru
      _
    // Predicated region
    $region6: #{srbmgl2_loss.1} parent=1 // pred_check
      _
    $region7: #{srbmgl2_loss.1} parent=1 // pred_check_branch
      %14 = sbr.rel (0) target = $region9
    $region8: #{srbmgl2_loss.1} parent=1 // pred_region
      _
    $region9: #{srbmgl2_loss.1} parent=1 // pred_fallthru
      _
    %v15 = vld [vmem:[%s0] sm:$0xff]
    %v16 = vld [vmem:[%s0 + $0x8] sm:$0xff]
    %v17 = vld [vmem:[%s0 + $0x10] sm:$0xff]
    %v18 = vld [vmem:[%s0 + $0x18] sm:$0xff]
    %v19 = vld [vmem:[%s0 + $0x20] sm:$0xff]
    %v20 = vld [vmem:[%s0 + $0x28] sm:$0xff]
    %v21 = vld [vmem:[%s0 + $0x30] sm:$0xff]
    %v22 = vld [vmem:[%s0 + $0x38] sm:$0xff]
    %v23 = vld [vmem:[%s0 + $0x40] sm:$0x1]
    %v24 = vld [vmem:[%s0 + $0x48] sm:$0xff]
    %v25 = vld [vmem:[%s0 + $0x50] sm:$0xff]
    %v26 = vld [vmem:[%s0 + $0x58] sm:$0xff]
    %v27 = vld [vmem:[%s0 + $0x60] sm:$0xff]
    %v28 = vld [vmem:[%s0 + $0x68] sm:$0x1]
    %v29 = vld [vmem:[%s0 + $0x69] sm:$0x1]
    %v30 = vld [vmem:[%s0 + $0x6a] sm:$0x1]
    %v31 = vld [vmem:[%s0 + $0x6b] sm:$0x1]
    %v32 = vld [vmem:[%s0 + $0x6c] sm:$0x3]
    %v33 = vld [vmem:[%s0 + $0x6e] sm:$0x1]
    %vm34 = vcmask 261120
    %v36 = vsel %vm34, 0.01, 0
    %38 = vmatprep.subr.mxu0 0.0
    %39 = vmatpush1.msra.mxu0 %v15
    %40 = vmatprep.subr.mxu0 0.0
    %41 = vmatpush1.msra.mxu0 %v16
    %42 = vmatprep.subr.mxu0 0.0
    %43 = vmatpush1.msra.mxu0 %v17
    %44 = vmatprep.subr.mxu0 0.0
    %45 = vmatpush1.msra.mxu0 %v18
    %46 = vmatprep.subr.mxu0 0.0
    %47 = vmatpush1.msra.mxu0 0.0
    %48 = vmatprep.subr.mxu0 0.0
    %49 = vmatpush1.msra.mxu0 0.0
    %50 = vmatprep.subr.mxu0 0.0
    %51 = vmatpush1.msra.mxu0 0.0
    %52 = vmatprep.subr.mxu0 0.0
    %53 = vmatpush1.msra.mxu0 0.0
    %54 = vmatprep.subr.mxu0 0.0
    %55 = vmatpush1.msra.mxu0 0.0
    %56 = vmatprep.subr.mxu0 0.0
    %57 = vmatpush1.msra.mxu0 0.0
    %58 = vmatprep.subr.mxu0 0.0
    %59 = vmatpush1.msra.mxu0 0.0
    %60 = vmatprep.subr.mxu0 0.0
    %61 = vmatpush1.msra.mxu0 0.0
    %62 = vmatprep.subr.mxu0 0.0
    %63 = vmatpush1.msra.mxu0 0.0
    %64 = vmatprep.subr.mxu0 0.0
    %65 = vmatpush1.msra.mxu0 0.0
    %66 = vmatprep.subr.mxu0 0.0
    %67 = vmatpush1.msra.mxu0 0.0
    %68 = vmatprep.subr.mxu0 0.0
    %69 = vmatpush1.msra.mxu0 0.0
    %70 = vmatprep.subr.mxu0 0.0
    %71 = vmatpush1.msra.mxu0 0.0
    %72 = vmatprep.subr.mxu0 0.0
    %73 = vmatpush1.msra.mxu0 0.0
    %74 = vmatprep.subr.mxu0 0.0
    %75 = vmatpush1.msra.mxu0 0.0
    %76 = vmatprep.subr.mxu0 0.0
    %77 = vmatpush1.msra.mxu0 0.0
    %78 = vmatprep.subr.mxu0 0.0
    %79 = vmatpush1.msra.mxu0 0.0
    %80 = vmatprep.subr.mxu0 0.0
    %81 = vmatpush1.msra.mxu0 0.0
    %82 = vmatprep.subr.mxu0 0.0
    %83 = vmatpush1.msra.mxu0 0.0
    %84 = vmatprep.subr.mxu0 0.0
    %85 = vmatpush1.msra.mxu0 0.0
    %86 = vmatprep.subr.mxu0 0.0
    %87 = vmatpush1.msra.mxu0 0.0
    %88 = vmatprep.subr.mxu0 0.0
    %89 = vmatpush1.msra.mxu0 0.0
    %90 = vmatprep.subr.mxu0 0.0
    %91 = vmatpush1.msra.mxu0 0.0
    %92 = vmatprep.subr.mxu0 0.0
    %93 = vmatpush1.msra.mxu0 0.0
    %94 = vmatprep.subr.mxu0 0.0
    %95 = vmatpush1.msra.mxu0 0.0
    %96 = vmatprep.subr.mxu0 0.0
    %97 = vmatpush1.msra.mxu0 0.0
    %98 = vmatprep.subr.mxu0 0.0
    %99 = vmatpush1.msra.mxu0 0.0
    %100 = vmatprep.subr.mxu0 0.0
    %101 = vmatpush1.msra.mxu0 0.0
    %102 = vmatprep.mubr.f32.mxu0 0.0
    %103 = vmatmul.mubr.f32.gmra.mrb[0].mxu0 %v36
    %v104 = vpop.f32.mrb[0].mxu0
    %v105 = vadd.f32 0.0, %v104
    %v106 = vpop.f32.mrb[0].mxu0
    %107 = vdwg.mxu0
    %v108 = vsub.f32 %v32, %v105
    %s110 = vtos %v33
    %v111 = vstv %s110
    %v113 = vmul.f32 %v108, %v111
    %v114 = vlaneseq
    %v115 = vshrl.u32 %v114, 7
    %v116 = vsub.s32 0, %v115
    %v117 = vrot.slane %v28, %v116
    %vm118 = vcmask 269312
    %v119 = vsel %vm118, 0.01, 0
    %vm121 = vcmask 1040384
    %v123 = vsel %vm121, %v23, 0
    %125 = vmatprep.subr.mxu0 0.0
    %126 = vmatpush1.msra.mxu0 %v19
    %127 = vmatprep.subr.mxu0 0.0
    %128 = vmatpush1.msra.mxu0 %v20
    %129 = vmatprep.subr.mxu0 0.0
    %130 = vmatpush1.msra.mxu0 %v21
    %131 = vmatprep.subr.mxu0 0.0
    %132 = vmatpush1.msra.mxu0 %v22
    %133 = vmatprep.subr.mxu0 0.0
    %134 = vmatpush1.msra.mxu0 %v123
    %135 = vmatprep.subr.mxu0 0.0
    %136 = vmatpush1.msra.mxu0 0.0
    %137 = vmatprep.subr.mxu0 0.0
    %138 = vmatpush1.msra.mxu0 0.0
    %139 = vmatprep.subr.mxu0 0.0
    %140 = vmatpush1.msra.mxu0 0.0
    %141 = vmatprep.subr.mxu0 0.0
    %142 = vmatpush1.msra.mxu0 0.0
    %143 = vmatprep.subr.mxu0 0.0
    %144 = vmatpush1.msra.mxu0 0.0
    %145 = vmatprep.subr.mxu0 0.0
    %146 = vmatpush1.msra.mxu0 0.0
    %147 = vmatprep.subr.mxu0 0.0
    %148 = vmatpush1.msra.mxu0 0.0
    %149 = vmatprep.subr.mxu0 0.0
    %150 = vmatpush1.msra.mxu0 0.0
    %151 = vmatprep.subr.mxu0 0.0
    %152 = vmatpush1.msra.mxu0 0.0
    %153 = vmatprep.subr.mxu0 0.0
    %154 = vmatpush1.msra.mxu0 0.0
    %155 = vmatprep.subr.mxu0 0.0
    %156 = vmatpush1.msra.mxu0 0.0
    %157 = vmatprep.subr.mxu0 0.0
    %158 = vmatpush1.msra.mxu0 0.0
    %159 = vmatprep.subr.mxu0 0.0
    %160 = vmatpush1.msra.mxu0 0.0
    %161 = vmatprep.subr.mxu0 0.0
    %162 = vmatpush1.msra.mxu0 0.0
    %163 = vmatprep.subr.mxu0 0.0
    %164 = vmatpush1.msra.mxu0 0.0
    %165 = vmatprep.subr.mxu0 0.0
    %166 = vmatpush1.msra.mxu0 0.0
    %167 = vmatprep.subr.mxu0 0.0
    %168 = vmatpush1.msra.mxu0 0.0
    %169 = vmatprep.subr.mxu0 0.0
    %170 = vmatpush1.msra.mxu0 0.0
    %171 = vmatprep.subr.mxu0 0.0
    %172 = vmatpush1.msra.mxu0 0.0
    %173 = vmatprep.subr.mxu0 0.0
    %174 = vmatpush1.msra.mxu0 0.0
    %175 = vmatprep.subr.mxu0 0.0
    %176 = vmatpush1.msra.mxu0 0.0
    %177 = vmatprep.subr.mxu0 0.0
    %178 = vmatpush1.msra.mxu0 0.0
    %179 = vmatprep.subr.mxu0 0.0
    %180 = vmatpush1.msra.mxu0 0.0
    %181 = vmatprep.subr.mxu0 0.0
    %182 = vmatpush1.msra.mxu0 0.0
    %183 = vmatprep.subr.mxu0 0.0
    %184 = vmatpush1.msra.mxu0 0.0
    %185 = vmatprep.subr.mxu0 0.0
    %186 = vmatpush1.msra.mxu0 0.0
    %187 = vmatprep.subr.mxu0 0.0
    %188 = vmatpush1.msra.mxu0 0.0
    %189 = vmatprep.mubr.f32.mxu0 0.0
    %190 = vmatmul.mubr.f32.gmra.mrb[0].mxu0 %v119
    %v191 = vpop.f32.mrb[0].mxu0
    %v192 = vadd.f32 %v117, %v191
    %v193 = vpop.f32.mrb[0].mxu0
    %194 = vdwg.mxu0
    %v195 = vsub.f32 0.0, %v192
    %v196 = vmax.f32 %v195, 0.0
    %vm197 = vcmp.ne.f32.partialorder %v195, %v195
    %v198 = vadd.f32 %v195, 0.0
    %v199 = vand.u32 2147483647, %v195
    %v200 = vsub.f32 0.0, %v199
    %v201 = vmul.f32 %v200, 1.442695
    %v202 = vpow.pop %v201
    %v203 = vadd.f32 %v202, 1.0
    %v204 = vlog2.pop %v203
    %v205 = vmul.f32 %v204, 0.6931472
    %v206 = vmul.f32 -0.5, %v202
    %v207 = vadd.f32 %v206, 1.0
    %v208 = vmul.f32 %v207, %v202
    %v209 = vand.u32 2147483647, %v202
    %vm210 = vcmp.lt.f32.partialorder %v209, 0.0004427343
    %v211 = vsel %vm210, %v208, %v205
    %v212 = vadd.f32 %v196, %v211
    %v213 = vsel %vm197, %v198, %v212
    %v214 = vsub.f32 0.0, %v213
    %v215 = vxor.u32 %v192, 2147483648
    %v216 = vmul.f32 %v215, 1.442695
    %v217 = vpow.pop %v216
    %v218 = vadd.f32 %v217, 1.0
    %v219 = vrcp.pop %v218
    %v220 = vmul.f32 1.0, %v219
    %v221 = vsub.f32 1.0, %v220
    %v222 = vmul.f32 %v221, 0.01
    %v223 = vlaneseq
    %v224 = vshrl.u32 %v223, 7
    %v225 = vsub.s32 0, %v224
    %v226 = vrot.slane %v30, %v225
    %v228 = vsel %vm34, %v222, 0
    %230 = vmatprep.subr.mxu0 0.0
    %231 = vmatpush1.msra.mxu0 %v24
    %232 = vmatprep.subr.mxu0 0.0
    %233 = vmatpush1.msra.mxu0 %v25
    %234 = vmatprep.subr.mxu0 0.0
    %235 = vmatpush1.msra.mxu0 %v26
    %236 = vmatprep.subr.mxu0 0.0
    %237 = vmatpush1.msra.mxu0 %v27
    %238 = vmatprep.subr.mxu0 0.0
    %239 = vmatpush1.msra.mxu0 0.0
    %240 = vmatprep.subr.mxu0 0.0
    %241 = vmatpush1.msra.mxu0 0.0
    %242 = vmatprep.subr.mxu0 0.0
    %243 = vmatpush1.msra.mxu0 0.0
    %244 = vmatprep.subr.mxu0 0.0
    %245 = vmatpush1.msra.mxu0 0.0
    %246 = vmatprep.subr.mxu0 0.0
    %247 = vmatpush1.msra.mxu0 0.0
    %248 = vmatprep.subr.mxu0 0.0
    %249 = vmatpush1.msra.mxu0 0.0
    %250 = vmatprep.subr.mxu0 0.0
    %251 = vmatpush1.msra.mxu0 0.0
    %252 = vmatprep.subr.mxu0 0.0
    %253 = vmatpush1.msra.mxu0 0.0
    %254 = vmatprep.subr.mxu0 0.0
    %255 = vmatpush1.msra.mxu0 0.0
    %256 = vmatprep.subr.mxu0 0.0
    %257 = vmatpush1.msra.mxu0 0.0
    %258 = vmatprep.subr.mxu0 0.0
    %259 = vmatpush1.msra.mxu0 0.0
    %260 = vmatprep.subr.mxu0 0.0
    %261 = vmatpush1.msra.mxu0 0.0
    %262 = vmatprep.subr.mxu0 0.0
    %263 = vmatpush1.msra.mxu0 0.0
    %264 = vmatprep.subr.mxu0 0.0
    %265 = vmatpush1.msra.mxu0 0.0
    %266 = vmatprep.subr.mxu0 0.0
    %267 = vmatpush1.msra.mxu0 0.0
    %268 = vmatprep.subr.mxu0 0.0
    %269 = vmatpush1.msra.mxu0 0.0
    %270 = vmatprep.subr.mxu0 0.0
    %271 = vmatpush1.msra.mxu0 0.0
    %272 = vmatprep.subr.mxu0 0.0
    %273 = vmatpush1.msra.mxu0 0.0
    %274 = vmatprep.subr.mxu0 0.0
    %275 = vmatpush1.msra.mxu0 0.0
    %276 = vmatprep.subr.mxu0 0.0
    %277 = vmatpush1.msra.mxu0 0.0
    %278 = vmatprep.subr.mxu0 0.0
    %279 = vmatpush1.msra.mxu0 0.0
    %280 = vmatprep.subr.mxu0 0.0
    %281 = vmatpush1.msra.mxu0 0.0
    %282 = vmatprep.subr.mxu0 0.0
    %283 = vmatpush1.msra.mxu0 0.0
    %284 = vmatprep.subr.mxu0 0.0
    %285 = vmatpush1.msra.mxu0 0.0
    %286 = vmatprep.subr.mxu0 0.0
    %287 = vmatpush1.msra.mxu0 0.0
    %288 = vmatprep.subr.mxu0 0.0
    %289 = vmatpush1.msra.mxu0 0.0
    %290 = vmatprep.subr.mxu0 0.0
    %291 = vmatpush1.msra.mxu0 0.0
    %292 = vmatprep.subr.mxu0 0.0
    %293 = vmatpush1.msra.mxu0 0.0
    %294 = vmatprep.mubr.f32.mxu0 0.0
    %295 = vmatmul.mubr.f32.gmra.mrb[0].mxu0 %v228
    %v296 = vpop.f32.mrb[0].mxu0
    %v297 = vadd.f32 %v226, %v296
    %v298 = vpop.f32.mrb[0].mxu0
    %299 = vdwg.mxu0
    %v300 = vadd.f32 %v113, %v214
    %v301 = vxor.u32 %v300, 2147483648
    %v302 = vmul.f32 %v301, 1.442695
    %v303 = vpow.pop %v302
    %v304 = vadd.f32 %v303, 1.0
    %v305 = vrcp.pop %v304
    %v306 = vmul.f32 1.0, %v305
    %v307 = vxor.u32 %v297, 2147483648
    %v308 = vmul.f32 %v307, 1.442695
    %v309 = vpow.pop %v308
    %v310 = vadd.f32 %v309, 1.0
    %v311 = vrcp.pop %v310
    %v312 = vmul.f32 1.0, %v311
    %v313 = vld [vmem:[%s1] sm:$0x3]
    %v314 = vld [vmem:[%s1 + $0x8] sm:$0x3]
    %vm315 = vcmp.lt.f32.partialorder %v313, 0.5
    %v316 = vadd.f32 %v306, 0.01
    %v317 = vmul.f32 %v316, 0.5
    %v318 = vsel %vm315, %v317, 0.01
    %vm319 = vcmp.lt.f32.partialorder %v314, 0.5
    %v320 = vadd.f32 %v312, 0.01
    %v321 = vmul.f32 %v320, 0.5
    %v322 = vsel %vm319, %v321, 0.01
    %v324 = vsel %vm34, %v318, 0
    %326 = vmatprep.subr.mxu0 0.0
    %327 = vmatpush1.msra.mxu0 %v15
    %328 = vmatprep.subr.mxu0 0.0
    %329 = vmatpush1.msra.mxu0 %v16
    %330 = vmatprep.subr.mxu0 0.0
    %331 = vmatpush1.msra.mxu0 %v17
    %332 = vmatprep.subr.mxu0 0.0
    %333 = vmatpush1.msra.mxu0 %v18
    %334 = vmatprep.subr.mxu0 0.0
    %335 = vmatpush1.msra.mxu0 0.0
    %336 = vmatprep.subr.mxu0 0.0
    %337 = vmatpush1.msra.mxu0 0.0
    %338 = vmatprep.subr.mxu0 0.0
    %339 = vmatpush1.msra.mxu0 0.0
    %340 = vmatprep.subr.mxu0 0.0
    %341 = vmatpush1.msra.mxu0 0.0
    %342 = vmatprep.subr.mxu0 0.0
    %343 = vmatpush1.msra.mxu0 0.0
    %344 = vmatprep.subr.mxu0 0.0
    %345 = vmatpush1.msra.mxu0 0.0
    %346 = vmatprep.subr.mxu0 0.0
    %347 = vmatpush1.msra.mxu0 0.0
    %348 = vmatprep.subr.mxu0 0.0
    %349 = vmatpush1.msra.mxu0 0.0
    %350 = vmatprep.subr.mxu0 0.0
    %351 = vmatpush1.msra.mxu0 0.0
    %352 = vmatprep.subr.mxu0 0.0
    %353 = vmatpush1.msra.mxu0 0.0
    %354 = vmatprep.subr.mxu0 0.0
    %355 = vmatpush1.msra.mxu0 0.0
    %356 = vmatprep.subr.mxu0 0.0
    %357 = vmatpush1.msra.mxu0 0.0
    %358 = vmatprep.subr.mxu0 0.0
    %359 = vmatpush1.msra.mxu0 0.0
    %360 = vmatprep.subr.mxu0 0.0
    %361 = vmatpush1.msra.mxu0 0.0
    %362 = vmatprep.subr.mxu0 0.0
    %363 = vmatpush1.msra.mxu0 0.0
    %364 = vmatprep.subr.mxu0 0.0
    %365 = vmatpush1.msra.mxu0 0.0
    %366 = vmatprep.subr.mxu0 0.0
    %367 = vmatpush1.msra.mxu0 0.0
    %368 = vmatprep.subr.mxu0 0.0
    %369 = vmatpush1.msra.mxu0 0.0
    %370 = vmatprep.subr.mxu0 0.0
    %371 = vmatpush1.msra.mxu0 0.0
    %372 = vmatprep.subr.mxu0 0.0
    %373 = vmatpush1.msra.mxu0 0.0
    %374 = vmatprep.subr.mxu0 0.0
    %375 = vmatpush1.msra.mxu0 0.0
    %376 = vmatprep.subr.mxu0 0.0
    %377 = vmatpush1.msra.mxu0 0.0
    %378 = vmatprep.subr.mxu0 0.0
    %379 = vmatpush1.msra.mxu0 0.0
    %380 = vmatprep.subr.mxu0 0.0
    %381 = vmatpush1.msra.mxu0 0.0
    %382 = vmatprep.subr.mxu0 0.0
    %383 = vmatpush1.msra.mxu0 0.0
    %384 = vmatprep.subr.mxu0 0.0
    %385 = vmatpush1.msra.mxu0 0.0
    %386 = vmatprep.subr.mxu0 0.0
    %387 = vmatpush1.msra.mxu0 0.0
    %388 = vmatprep.subr.mxu0 0.0
    %389 = vmatpush1.msra.mxu0 0.0
    %390 = vmatprep.mubr.f32.mxu0 0.0
    %391 = vmatmul.mubr.f32.gmra.mrb[0].mxu0 %v324
    %v392 = vpop.f32.mrb[0].mxu0
    %v393 = vadd.f32 0.0, %v392
    %v394 = vpop.f32.mrb[0].mxu0
    %395 = vdwg.mxu0
    %v396 = vsub.f32 %v32, %v393
    %v397 = vmul.f32 %v396, %v111
    %v399 = vsel %vm118, %v322, 0
    %401 = vmatprep.subr.mxu0 0.0
    %402 = vmatpush1.msra.mxu0 %v19
    %403 = vmatprep.subr.mxu0 0.0
    %404 = vmatpush1.msra.mxu0 %v20
    %405 = vmatprep.subr.mxu0 0.0
    %406 = vmatpush1.msra.mxu0 %v21
    %407 = vmatprep.subr.mxu0 0.0
    %408 = vmatpush1.msra.mxu0 %v22
    %409 = vmatprep.subr.mxu0 0.0
    %410 = vmatpush1.msra.mxu0 %v123
    %411 = vmatprep.subr.mxu0 0.0
    %412 = vmatpush1.msra.mxu0 0.0
    %413 = vmatprep.subr.mxu0 0.0
    %414 = vmatpush1.msra.mxu0 0.0
    %415 = vmatprep.subr.mxu0 0.0
    %416 = vmatpush1.msra.mxu0 0.0
    %417 = vmatprep.subr.mxu0 0.0
    %418 = vmatpush1.msra.mxu0 0.0
    %419 = vmatprep.subr.mxu0 0.0
    %420 = vmatpush1.msra.mxu0 0.0
    %421 = vmatprep.subr.mxu0 0.0
    %422 = vmatpush1.msra.mxu0 0.0
    %423 = vmatprep.subr.mxu0 0.0
    %424 = vmatpush1.msra.mxu0 0.0
    %425 = vmatprep.subr.mxu0 0.0
    %426 = vmatpush1.msra.mxu0 0.0
    %427 = vmatprep.subr.mxu0 0.0
    %428 = vmatpush1.msra.mxu0 0.0
    %429 = vmatprep.subr.mxu0 0.0
    %430 = vmatpush1.msra.mxu0 0.0
    %431 = vmatprep.subr.mxu0 0.0
    %432 = vmatpush1.msra.mxu0 0.0
    %433 = vmatprep.subr.mxu0 0.0
    %434 = vmatpush1.msra.mxu0 0.0
    %435 = vmatprep.subr.mxu0 0.0
    %436 = vmatpush1.msra.mxu0 0.0
    %437 = vmatprep.subr.mxu0 0.0
    %438 = vmatpush1.msra.mxu0 0.0
    %439 = vmatprep.subr.mxu0 0.0
    %440 = vmatpush1.msra.mxu0 0.0
    %441 = vmatprep.subr.mxu0 0.0
    %442 = vmatpush1.msra.mxu0 0.0
    %443 = vmatprep.subr.mxu0 0.0
    %444 = vmatpush1.msra.mxu0 0.0
    %445 = vmatprep.subr.mxu0 0.0
    %446 = vmatpush1.msra.mxu0 0.0
    %447 = vmatprep.subr.mxu0 0.0
    %448 = vmatpush1.msra.mxu0 0.0
    %449 = vmatprep.subr.mxu0 0.0
    %450 = vmatpush1.msra.mxu0 0.0
    %451 = vmatprep.subr.mxu0 0.0
    %452 = vmatpush1.msra.mxu0 0.0
    %453 = vmatprep.subr.mxu0 0.0
    %454 = vmatpush1.msra.mxu0 0.0
    %455 = vmatprep.subr.mxu0 0.0
    %456 = vmatpush1.msra.mxu0 0.0
    %457 = vmatprep.subr.mxu0 0.0
    %458 = vmatpush1.msra.mxu0 0.0
    %459 = vmatprep.subr.mxu0 0.0
    %460 = vmatpush1.msra.mxu0 0.0
    %461 = vmatprep.subr.mxu0 0.0
    %462 = vmatpush1.msra.mxu0 0.0
    %463 = vmatprep.subr.mxu0 0.0
    %464 = vmatpush1.msra.mxu0 0.0
    %465 = vmatprep.mubr.f32.mxu0 0.0
    %466 = vmatmul.mubr.f32.gmra.mrb[0].mxu0 %v399
    %v467 = vpop.f32.mrb[0].mxu0
    %v468 = vadd.f32 %v117, %v467
    %v469 = vpop.f32.mrb[0].mxu0
    %470 = vdwg.mxu0
    %v471 = vsub.f32 0.0, %v468
    %v472 = vmax.f32 %v471, 0.0
    %vm473 = vcmp.ne.f32.partialorder %v471, %v471
    %v474 = vadd.f32 %v471, 0.0
    %v475 = vand.u32 2147483647, %v471
    %v476 = vsub.f32 0.0, %v475
    %v477 = vmul.f32 %v476, 1.442695
    %v478 = vpow.pop %v477
    %v479 = vadd.f32 %v478, 1.0
    %v480 = vlog2.pop %v479
    %v481 = vmul.f32 %v480, 0.6931472
    %v482 = vmul.f32 -0.5, %v478
    %v483 = vadd.f32 %v482, 1.0
    %v484 = vmul.f32 %v483, %v478
    %v485 = vand.u32 2147483647, %v478
    %vm486 = vcmp.lt.f32.partialorder %v485, 0.0004427343
    %v487 = vsel %vm486, %v484, %v481
    %v488 = vadd.f32 %v472, %v487
    %v489 = vsel %vm473, %v474, %v488
    %v490 = vsub.f32 0.0, %v489
    %v491 = vxor.u32 %v468, 2147483648
    %v492 = vmul.f32 %v491, 1.442695
    %v493 = vpow.pop %v492
    %v494 = vadd.f32 %v493, 1.0
    %v495 = vrcp.pop %v494
    %v496 = vmul.f32 1.0, %v495
    %v497 = vsub.f32 1.0, %v496
    %v498 = vmul.f32 %v318, %v497
    %v500 = vsel %vm34, %v498, 0
    %502 = vmatprep.subr.mxu0 0.0
    %503 = vmatpush1.msra.mxu0 %v24
    %504 = vmatprep.subr.mxu0 0.0
    %505 = vmatpush1.msra.mxu0 %v25
    %506 = vmatprep.subr.mxu0 0.0
    %507 = vmatpush1.msra.mxu0 %v26
    %508 = vmatprep.subr.mxu0 0.0
    %509 = vmatpush1.msra.mxu0 %v27
    %510 = vmatprep.subr.mxu0 0.0
    %511 = vmatpush1.msra.mxu0 0.0
    %512 = vmatprep.subr.mxu0 0.0
    %513 = vmatpush1.msra.mxu0 0.0
    %514 = vmatprep.subr.mxu0 0.0
    %515 = vmatpush1.msra.mxu0 0.0
    %516 = vmatprep.subr.mxu0 0.0
    %517 = vmatpush1.msra.mxu0 0.0
    %518 = vmatprep.subr.mxu0 0.0
    %519 = vmatpush1.msra.mxu0 0.0
    %520 = vmatprep.subr.mxu0 0.0
    %521 = vmatpush1.msra.mxu0 0.0
    %522 = vmatprep.subr.mxu0 0.0
    %523 = vmatpush1.msra.mxu0 0.0
    %524 = vmatprep.subr.mxu0 0.0
    %525 = vmatpush1.msra.mxu0 0.0
    %526 = vmatprep.subr.mxu0 0.0
    %527 = vmatpush1.msra.mxu0 0.0
    %528 = vmatprep.subr.mxu0 0.0
    %529 = vmatpush1.msra.mxu0 0.0
    %530 = vmatprep.subr.mxu0 0.0
    %531 = vmatpush1.msra.mxu0 0.0
    %532 = vmatprep.subr.mxu0 0.0
    %533 = vmatpush1.msra.mxu0 0.0
    %534 = vmatprep.subr.mxu0 0.0
    %535 = vmatpush1.msra.mxu0 0.0
    %536 = vmatprep.subr.mxu0 0.0
    %537 = vmatpush1.msra.mxu0 0.0
    %538 = vmatprep.subr.mxu0 0.0
    %539 = vmatpush1.msra.mxu0 0.0
    %540 = vmatprep.subr.mxu0 0.0
    %541 = vmatpush1.msra.mxu0 0.0
    %542 = vmatprep.subr.mxu0 0.0
    %543 = vmatpush1.msra.mxu0 0.0
    %544 = vmatprep.subr.mxu0 0.0
    %545 = vmatpush1.msra.mxu0 0.0
    %546 = vmatprep.subr.mxu0 0.0
    %547 = vmatpush1.msra.mxu0 0.0
    %548 = vmatprep.subr.mxu0 0.0
    %549 = vmatpush1.msra.mxu0 0.0
    %550 = vmatprep.subr.mxu0 0.0
    %551 = vmatpush1.msra.mxu0 0.0
    %552 = vmatprep.subr.mxu0 0.0
    %553 = vmatpush1.msra.mxu0 0.0
    %554 = vmatprep.subr.mxu0 0.0
    %555 = vmatpush1.msra.mxu0 0.0
    %556 = vmatprep.subr.mxu0 0.0
    %557 = vmatpush1.msra.mxu0 0.0
    %558 = vmatprep.subr.mxu0 0.0
    %559 = vmatpush1.msra.mxu0 0.0
    %560 = vmatprep.subr.mxu0 0.0
    %561 = vmatpush1.msra.mxu0 0.0
    %562 = vmatprep.subr.mxu0 0.0
    %563 = vmatpush1.msra.mxu0 0.0
    %564 = vmatprep.subr.mxu0 0.0
    %565 = vmatpush1.msra.mxu0 0.0
    %566 = vmatprep.mubr.f32.mxu0 0.0
    %567 = vmatmul.mubr.f32.gmra.mrb[0].mxu0 %v500
    %v568 = vpop.f32.mrb[0].mxu0
    %v569 = vadd.f32 %v226, %v568
    %v570 = vpop.f32.mrb[0].mxu0
    %571 = vdwg.mxu0
    %v572 = vadd.f32 %v397, %v490
    %v573 = vxor.u32 %v572, 2147483648
    %v574 = vmul.f32 %v573, 1.442695
    %v575 = vpow.pop %v574
    %v576 = vadd.f32 %v575, 1.0
    %v577 = vrcp.pop %v576
    %v578 = vmul.f32 1.0, %v577
    %v579 = vxor.u32 %v569, 2147483648
    %v580 = vmul.f32 %v579, 1.442695
    %v581 = vpow.pop %v580
    %v582 = vadd.f32 %v581, 1.0
    %v583 = vrcp.pop %v582
    %v584 = vmul.f32 1.0, %v583
    %v585 = vld [vmem:[%s1 + $0x2] sm:$0x3]
    %v586 = vld [vmem:[%s1 + $0xa] sm:$0x3]
    %vm587 = vcmp.lt.f32.partialorder %v585, 0.5
    %v588 = vadd.f32 %v578, %v318
    %v589 = vmul.f32 %v588, 0.5
    %v590 = vsel %vm587, %v589, %v318
    %vm591 = vcmp.lt.f32.partialorder %v586, 0.5
    %v592 = vadd.f32 %v584, %v322
    %v593 = vmul.f32 %v592, 0.5
    %v594 = vsel %vm591, %v593, %v322
    %v596 = vsel %vm34, %v590, 0
    %598 = vmatprep.subr.mxu0 0.0
    %599 = vmatpush1.msra.mxu0 %v15
    %600 = vmatprep.subr.mxu0 0.0
    %601 = vmatpush1.msra.mxu0 %v16
    %602 = vmatprep.subr.mxu0 0.0
    %603 = vmatpush1.msra.mxu0 %v17
    %604 = vmatprep.subr.mxu0 0.0
    %605 = vmatpush1.msra.mxu0 %v18
    %606 = vmatprep.subr.mxu0 0.0
    %607 = vmatpush1.msra.mxu0 0.0
    %608 = vmatprep.subr.mxu0 0.0
    %609 = vmatpush1.msra.mxu0 0.0
    %610 = vmatprep.subr.mxu0 0.0
    %611 = vmatpush1.msra.mxu0 0.0
    %612 = vmatprep.subr.mxu0 0.0
    %613 = vmatpush1.msra.mxu0 0.0
    %614 = vmatprep.subr.mxu0 0.0
    %615 = vmatpush1.msra.mxu0 0.0
    %616 = vmatprep.subr.mxu0 0.0
    %617 = vmatpush1.msra.mxu0 0.0
    %618 = vmatprep.subr.mxu0 0.0
    %619 = vmatpush1.msra.mxu0 0.0
    %620 = vmatprep.subr.mxu0 0.0
    %621 = vmatpush1.msra.mxu0 0.0
    %622 = vmatprep.subr.mxu0 0.0
    %623 = vmatpush1.msra.mxu0 0.0
    %624 = vmatprep.subr.mxu0 0.0
    %625 = vmatpush1.msra.mxu0 0.0
    %626 = vmatprep.subr.mxu0 0.0
    %627 = vmatpush1.msra.mxu0 0.0
    %628 = vmatprep.subr.mxu0 0.0
    %629 = vmatpush1.msra.mxu0 0.0
    %630 = vmatprep.subr.mxu0 0.0
    %631 = vmatpush1.msra.mxu0 0.0
    %632 = vmatprep.subr.mxu0 0.0
    %633 = vmatpush1.msra.mxu0 0.0
    %634 = vmatprep.subr.mxu0 0.0
    %635 = vmatpush1.msra.mxu0 0.0
    %636 = vmatprep.subr.mxu0 0.0
    %637 = vmatpush1.msra.mxu0 0.0
    %638 = vmatprep.subr.mxu0 0.0
    %639 = vmatpush1.msra.mxu0 0.0
    %640 = vmatprep.subr.mxu0 0.0
    %641 = vmatpush1.msra.mxu0 0.0
    %642 = vmatprep.subr.mxu0 0.0
    %643 = vmatpush1.msra.mxu0 0.0
    %644 = vmatprep.subr.mxu0 0.0
    %645 = vmatpush1.msra.mxu0 0.0
    %646 = vmatprep.subr.mxu0 0.0
    %647 = vmatpush1.msra.mxu0 0.0
    %648 = vmatprep.subr.mxu0 0.0
    %649 = vmatpush1.msra.mxu0 0.0
    %650 = vmatprep.subr.mxu0 0.0
    %651 = vmatpush1.msra.mxu0 0.0
    %652 = vmatprep.subr.mxu0 0.0
    %653 = vmatpush1.msra.mxu0 0.0
    %654 = vmatprep.subr.mxu0 0.0
    %655 = vmatpush1.msra.mxu0 0.0
    %656 = vmatprep.subr.mxu0 0.0
    %657 = vmatpush1.msra.mxu0 0.0
    %658 = vmatprep.subr.mxu0 0.0
    %659 = vmatpush1.msra.mxu0 0.0
    %660 = vmatprep.subr.mxu0 0.0
    %661 = vmatpush1.msra.mxu0 0.0
    %662 = vmatprep.mubr.f32.mxu0 0.0
    %663 = vmatmul.mubr.f32.gmra.mrb[0].mxu0 %v596
    %v664 = vpop.f32.mrb[0].mxu0
    %v665 = vadd.f32 0.0, %v664
    %v666 = vpop.f32.mrb[0].mxu0
    %667 = vdwg.mxu0
    %v668 = vsub.f32 %v32, %v665
    %v669 = vmul.f32 %v668, %v111
    %v671 = vsel %vm118, %v594, 0
    %673 = vmatprep.subr.mxu0 0.0
    %674 = vmatpush1.msra.mxu0 %v19
    %675 = vmatprep.subr.mxu0 0.0
    %676 = vmatpush1.msra.mxu0 %v20
    %677 = vmatprep.subr.mxu0 0.0
    %678 = vmatpush1.msra.mxu0 %v21
    %679 = vmatprep.subr.mxu0 0.0
    %680 = vmatpush1.msra.mxu0 %v22
    %681 = vmatprep.subr.mxu0 0.0
    %682 = vmatpush1.msra.mxu0 %v123
    %683 = vmatprep.subr.mxu0 0.0
    %684 = vmatpush1.msra.mxu0 0.0
    %685 = vmatprep.subr.mxu0 0.0
    %686 = vmatpush1.msra.mxu0 0.0
    %687 = vmatprep.subr.mxu0 0.0
    %688 = vmatpush1.msra.mxu0 0.0
    %689 = vmatprep.subr.mxu0 0.0
    %690 = vmatpush1.msra.mxu0 0.0
    %691 = vmatprep.subr.mxu0 0.0
    %692 = vmatpush1.msra.mxu0 0.0
    %693 = vmatprep.subr.mxu0 0.0
    %694 = vmatpush1.msra.mxu0 0.0
    %695 = vmatprep.subr.mxu0 0.0
    %696 = vmatpush1.msra.mxu0 0.0
    %697 = vmatprep.subr.mxu0 0.0
    %698 = vmatpush1.msra.mxu0 0.0
    %699 = vmatprep.subr.mxu0 0.0
    %700 = vmatpush1.msra.mxu0 0.0
    %701 = vmatprep.subr.mxu0 0.0
    %702 = vmatpush1.msra.mxu0 0.0
    %703 = vmatprep.subr.mxu0 0.0
    %704 = vmatpush1.msra.mxu0 0.0
    %705 = vmatprep.subr.mxu0 0.0
    %706 = vmatpush1.msra.mxu0 0.0
    %707 = vmatprep.subr.mxu0 0.0
    %708 = vmatpush1.msra.mxu0 0.0
    %709 = vmatprep.subr.mxu0 0.0
    %710 = vmatpush1.msra.mxu0 0.0
    %711 = vmatprep.subr.mxu0 0.0
    %712 = vmatpush1.msra.mxu0 0.0
    %713 = vmatprep.subr.mxu0 0.0
    %714 = vmatpush1.msra.mxu0 0.0
    %715 = vmatprep.subr.mxu0 0.0
    %716 = vmatpush1.msra.mxu0 0.0
    %717 = vmatprep.subr.mxu0 0.0
    %718 = vmatpush1.msra.mxu0 0.0
    %719 = vmatprep.subr.mxu0 0.0
    %720 = vmatpush1.msra.mxu0 0.0
    %721 = vmatprep.subr.mxu0 0.0
    %722 = vmatpush1.msra.mxu0 0.0
    %723 = vmatprep.subr.mxu0 0.0
    %724 = vmatpush1.msra.mxu0 0.0
    %725 = vmatprep.subr.mxu0 0.0
    %726 = vmatpush1.msra.mxu0 0.0
    %727 = vmatprep.subr.mxu0 0.0
    %728 = vmatpush1.msra.mxu0 0.0
    %729 = vmatprep.subr.mxu0 0.0
    %730 = vmatpush1.msra.mxu0 0.0
    %731 = vmatprep.subr.mxu0 0.0
    %732 = vmatpush1.msra.mxu0 0.0
    %733 = vmatprep.subr.mxu0 0.0
    %734 = vmatpush1.msra.mxu0 0.0
    %735 = vmatprep.subr.mxu0 0.0
    %736 = vmatpush1.msra.mxu0 0.0
    %737 = vmatprep.mubr.f32.mxu0 0.0
    %738 = vmatmul.mubr.f32.gmra.mrb[0].mxu0 %v671
    %v739 = vpop.f32.mrb[0].mxu0
    %v740 = vadd.f32 %v117, %v739
    %v741 = vpop.f32.mrb[0].mxu0
    %742 = vdwg.mxu0
    %v743 = vsub.f32 0.0, %v740
    %v744 = vmax.f32 %v743, 0.0
    %vm745 = vcmp.ne.f32.partialorder %v743, %v743
    %v746 = vadd.f32 %v743, 0.0
    %v747 = vand.u32 2147483647, %v743
    %v748 = vsub.f32 0.0, %v747
    %v749 = vmul.f32 %v748, 1.442695
    %v750 = vpow.pop %v749
    %v751 = vadd.f32 %v750, 1.0
    %v752 = vlog2.pop %v751
    %v753 = vmul.f32 %v752, 0.6931472
    %v754 = vmul.f32 -0.5, %v750
    %v755 = vadd.f32 %v754, 1.0
    %v756 = vmul.f32 %v755, %v750
    %v757 = vand.u32 2147483647, %v750
    %vm758 = vcmp.lt.f32.partialorder %v757, 0.0004427343
    %v759 = vsel %vm758, %v756, %v753
    %v760 = vadd.f32 %v744, %v759
    %v761 = vsel %vm745, %v746, %v760
    %v762 = vsub.f32 0.0, %v761
    %v763 = vxor.u32 %v740, 2147483648
    %v764 = vmul.f32 %v763, 1.442695
    %v765 = vpow.pop %v764
    %v766 = vadd.f32 %v765, 1.0
    %v767 = vrcp.pop %v766
    %v768 = vmul.f32 1.0, %v767
    %v769 = vsub.f32 1.0, %v768
    %v770 = vmul.f32 %v590, %v769
    %v772 = vsel %vm34, %v770, 0
    %774 = vmatprep.subr.mxu0 0.0
    %775 = vmatpush1.msra.mxu0 %v24
    %776 = vmatprep.subr.mxu0 0.0
    %777 = vmatpush1.msra.mxu0 %v25
    %778 = vmatprep.subr.mxu0 0.0
    %779 = vmatpush1.msra.mxu0 %v26
    %780 = vmatprep.subr.mxu0 0.0
    %781 = vmatpush1.msra.mxu0 %v27
    %782 = vmatprep.subr.mxu0 0.0
    %783 = vmatpush1.msra.mxu0 0.0
    %784 = vmatprep.subr.mxu0 0.0
    %785 = vmatpush1.msra.mxu0 0.0
    %786 = vmatprep.subr.mxu0 0.0
    %787 = vmatpush1.msra.mxu0 0.0
    %788 = vmatprep.subr.mxu0 0.0
    %789 = vmatpush1.msra.mxu0 0.0
    %790 = vmatprep.subr.mxu0 0.0
    %791 = vmatpush1.msra.mxu0 0.0
    %792 = vmatprep.subr.mxu0 0.0
    %793 = vmatpush1.msra.mxu0 0.0
    %794 = vmatprep.subr.mxu0 0.0
    %795 = vmatpush1.msra.mxu0 0.0
    %796 = vmatprep.subr.mxu0 0.0
    %797 = vmatpush1.msra.mxu0 0.0
    %798 = vmatprep.subr.mxu0 0.0
    %799 = vmatpush1.msra.mxu0 0.0
    %800 = vmatprep.subr.mxu0 0.0
    %801 = vmatpush1.msra.mxu0 0.0
    %802 = vmatprep.subr.mxu0 0.0
    %803 = vmatpush1.msra.mxu0 0.0
    %804 = vmatprep.subr.mxu0 0.0
    %805 = vmatpush1.msra.mxu0 0.0
    %806 = vmatprep.subr.mxu0 0.0
    %807 = vmatpush1.msra.mxu0 0.0
    %808 = vmatprep.subr.mxu0 0.0
    %809 = vmatpush1.msra.mxu0 0.0
    %810 = vmatprep.subr.mxu0 0.0
    %811 = vmatpush1.msra.mxu0 0.0
    %812 = vmatprep.subr.mxu0 0.0
    %813 = vmatpush1.msra.mxu0 0.0
    %814 = vmatprep.subr.mxu0 0.0
    %815 = vmatpush1.msra.mxu0 0.0
    %816 = vmatprep.subr.mxu0 0.0
    %817 = vmatpush1.msra.mxu0 0.0
    %818 = vmatprep.subr.mxu0 0.0
    %819 = vmatpush1.msra.mxu0 0.0
    %820 = vmatprep.subr.mxu0 0.0
    %821 = vmatpush1.msra.mxu0 0.0
    %822 = vmatprep.subr.mxu0 0.0
    %823 = vmatpush1.msra.mxu0 0.0
    %824 = vmatprep.subr.mxu0 0.0
    %825 = vmatpush1.msra.mxu0 0.0
    %826 = vmatprep.subr.mxu0 0.0
    %827 = vmatpush1.msra.mxu0 0.0
    %828 = vmatprep.subr.mxu0 0.0
    %829 = vmatpush1.msra.mxu0 0.0
    %830 = vmatprep.subr.mxu0 0.0
    %831 = vmatpush1.msra.mxu0 0.0
    %832 = vmatprep.subr.mxu0 0.0
    %833 = vmatpush1.msra.mxu0 0.0
    %834 = vmatprep.subr.mxu0 0.0
    %835 = vmatpush1.msra.mxu0 0.0
    %836 = vmatprep.subr.mxu0 0.0
    %837 = vmatpush1.msra.mxu0 0.0
    %838 = vmatprep.mubr.f32.mxu0 0.0
    %839 = vmatmul.mubr.f32.gmra.mrb[0].mxu0 %v772
    %v840 = vpop.f32.mrb[0].mxu0
    %v841 = vadd.f32 %v226, %v840
    %v842 = vpop.f32.mrb[0].mxu0
    %843 = vdwg.mxu0
    %v844 = vadd.f32 %v669, %v762
    %v845 = vxor.u32 %v844, 2147483648
    %v846 = vmul.f32 %v845, 1.442695
    %v847 = vpow.pop %v846
    %v848 = vadd.f32 %v847, 1.0
    %v849 = vrcp.pop %v848
    %v850 = vmul.f32 1.0, %v849
    %v851 = vxor.u32 %v841, 2147483648
    %v852 = vmul.f32 %v851, 1.442695
    %v853 = vpow.pop %v852
    %v854 = vadd.f32 %v853, 1.0
    %v855 = vrcp.pop %v854
    %v856 = vmul.f32 1.0, %v855
    %v857 = vld [vmem:[%s1 + $0x4] sm:$0x3]
    %v858 = vld [vmem:[%s1 + $0xc] sm:$0x3]
    %vm859 = vcmp.lt.f32.partialorder %v857, 0.5
    %v860 = vadd.f32 %v850, %v590
    %v861 = vmul.f32 %v860, 0.5
    %v862 = vsel %vm859, %v861, %v590
    %vm863 = vcmp.lt.f32.partialorder %v858, 0.5
    %v864 = vadd.f32 %v856, %v594
    %v865 = vmul.f32 %v864, 0.5
    %v866 = vsel %vm863, %v865, %v594
    %v868 = vsel %vm118, %v866, 0
    %870 = vmatprep.subr.mxu0 0.0
    %871 = vmatpush1.msra.mxu0 %v19
    %872 = vmatprep.subr.mxu0 0.0
    %873 = vmatpush1.msra.mxu0 %v20
    %874 = vmatprep.subr.mxu0 0.0
    %875 = vmatpush1.msra.mxu0 %v21
    %876 = vmatprep.subr.mxu0 0.0
    %877 = vmatpush1.msra.mxu0 %v22
    %878 = vmatprep.subr.mxu0 0.0
    %879 = vmatpush1.msra.mxu0 %v123
    %880 = vmatprep.subr.mxu0 0.0
    %881 = vmatpush1.msra.mxu0 0.0
    %882 = vmatprep.subr.mxu0 0.0
    %883 = vmatpush1.msra.mxu0 0.0
    %884 = vmatprep.subr.mxu0 0.0
    %885 = vmatpush1.msra.mxu0 0.0
    %886 = vmatprep.subr.mxu0 0.0
    %887 = vmatpush1.msra.mxu0 0.0
    %888 = vmatprep.subr.mxu0 0.0
    %889 = vmatpush1.msra.mxu0 0.0
    %890 = vmatprep.subr.mxu0 0.0
    %891 = vmatpush1.msra.mxu0 0.0
    %892 = vmatprep.subr.mxu0 0.0
    %893 = vmatpush1.msra.mxu0 0.0
    %894 = vmatprep.subr.mxu0 0.0
    %895 = vmatpush1.msra.mxu0 0.0
    %896 = vmatprep.subr.mxu0 0.0
    %897 = vmatpush1.msra.mxu0 0.0
    %898 = vmatprep.subr.mxu0 0.0
    %899 = vmatpush1.msra.mxu0 0.0
    %900 = vmatprep.subr.mxu0 0.0
    %901 = vmatpush1.msra.mxu0 0.0
    %902 = vmatprep.subr.mxu0 0.0
    %903 = vmatpush1.msra.mxu0 0.0
    %904 = vmatprep.subr.mxu0 0.0
    %905 = vmatpush1.msra.mxu0 0.0
    %906 = vmatprep.subr.mxu0 0.0
    %907 = vmatpush1.msra.mxu0 0.0
    %908 = vmatprep.subr.mxu0 0.0
    %909 = vmatpush1.msra.mxu0 0.0
    %910 = vmatprep.subr.mxu0 0.0
    %911 = vmatpush1.msra.mxu0 0.0
    %912 = vmatprep.subr.mxu0 0.0
    %913 = vmatpush1.msra.mxu0 0.0
    %914 = vmatprep.subr.mxu0 0.0
    %915 = vmatpush1.msra.mxu0 0.0
    %916 = vmatprep.subr.mxu0 0.0
    %917 = vmatpush1.msra.mxu0 0.0
    %918 = vmatprep.subr.mxu0 0.0
    %919 = vmatpush1.msra.mxu0 0.0
    %920 = vmatprep.subr.mxu0 0.0
    %921 = vmatpush1.msra.mxu0 0.0
    %922 = vmatprep.subr.mxu0 0.0
    %923 = vmatpush1.msra.mxu0 0.0
    %924 = vmatprep.subr.mxu0 0.0
    %925 = vmatpush1.msra.mxu0 0.0
    %926 = vmatprep.subr.mxu0 0.0
    %927 = vmatpush1.msra.mxu0 0.0
    %928 = vmatprep.subr.mxu0 0.0
    %929 = vmatpush1.msra.mxu0 0.0
    %930 = vmatprep.subr.mxu0 0.0
    %931 = vmatpush1.msra.mxu0 0.0
    %932 = vmatprep.subr.mxu0 0.0
    %933 = vmatpush1.msra.mxu0 0.0
    %934 = vmatprep.mubr.f32.mxu0 0.0
    %935 = vmatmul.mubr.f32.gmra.mrb[0].mxu0 %v868
    %v936 = vpop.f32.mrb[0].mxu0
    %v937 = vadd.f32 %v117, %v936
    %v938 = vpop.f32.mrb[0].mxu0
    %939 = vdwg.mxu0
    %v940 = vxor.u32 %v937, 2147483648
    %v941 = vmul.f32 %v940, 1.442695
    %v942 = vpow.pop %v941
    %v943 = vadd.f32 %v942, 1.0
    %v944 = vrcp.pop %v943
    %v945 = vmul.f32 1.0, %v944
    %v946 = vsub.f32 1.0, %v945
    %v947 = vmul.f32 %v862, %v946
    %v949 = vsel %vm34, %v947, 0
    %951 = vmatprep.subr.mxu0 0.0
    %952 = vmatpush1.msra.mxu0 %v24
    %953 = vmatprep.subr.mxu0 0.0
    %954 = vmatpush1.msra.mxu0 %v25
    %955 = vmatprep.subr.mxu0 0.0
    %956 = vmatpush1.msra.mxu0 %v26
    %957 = vmatprep.subr.mxu0 0.0
    %958 = vmatpush1.msra.mxu0 %v27
    %959 = vmatprep.subr.mxu0 0.0
    %960 = vmatpush1.msra.mxu0 0.0
    %961 = vmatprep.subr.mxu0 0.0
    %962 = vmatpush1.msra.mxu0 0.0
    %963 = vmatprep.subr.mxu0 0.0
    %964 = vmatpush1.msra.mxu0 0.0
    %965 = vmatprep.subr.mxu0 0.0
    %966 = vmatpush1.msra.mxu0 0.0
    %967 = vmatprep.subr.mxu0 0.0
    %968 = vmatpush1.msra.mxu0 0.0
    %969 = vmatprep.subr.mxu0 0.0
    %970 = vmatpush1.msra.mxu0 0.0
    %971 = vmatprep.subr.mxu0 0.0
    %972 = vmatpush1.msra.mxu0 0.0
    %973 = vmatprep.subr.mxu0 0.0
    %974 = vmatpush1.msra.mxu0 0.0
    %975 = vmatprep.subr.mxu0 0.0
    %976 = vmatpush1.msra.mxu0 0.0
    %977 = vmatprep.subr.mxu0 0.0
    %978 = vmatpush1.msra.mxu0 0.0
    %979 = vmatprep.subr.mxu0 0.0
    %980 = vmatpush1.msra.mxu0 0.0
    %981 = vmatprep.subr.mxu0 0.0
    %982 = vmatpush1.msra.mxu0 0.0
    %983 = vmatprep.subr.mxu0 0.0
    %984 = vmatpush1.msra.mxu0 0.0
    %985 = vmatprep.subr.mxu0 0.0
    %986 = vmatpush1.msra.mxu0 0.0
    %987 = vmatprep.subr.mxu0 0.0
    %988 = vmatpush1.msra.mxu0 0.0
    %989 = vmatprep.subr.mxu0 0.0
    %990 = vmatpush1.msra.mxu0 0.0
    %991 = vmatprep.subr.mxu0 0.0
    %992 = vmatpush1.msra.mxu0 0.0
    %993 = vmatprep.subr.mxu0 0.0
    %994 = vmatpush1.msra.mxu0 0.0
    %995 = vmatprep.subr.mxu0 0.0
    %996 = vmatpush1.msra.mxu0 0.0
    %997 = vmatprep.subr.mxu0 0.0
    %998 = vmatpush1.msra.mxu0 0.0
    %999 = vmatprep.subr.mxu0 0.0
    %1000 = vmatpush1.msra.mxu0 0.0
    %1001 = vmatprep.subr.mxu0 0.0
    %1002 = vmatpush1.msra.mxu0 0.0
    %1003 = vmatprep.subr.mxu0 0.0
    %1004 = vmatpush1.msra.mxu0 0.0
    %1005 = vmatprep.subr.mxu0 0.0
    %1006 = vmatpush1.msra.mxu0 0.0
    %1007 = vmatprep.subr.mxu0 0.0
    %1008 = vmatpush1.msra.mxu0 0.0
    %1009 = vmatprep.subr.mxu0 0.0
    %1010 = vmatpush1.msra.mxu0 0.0
    %1011 = vmatprep.subr.mxu0 0.0
    %1012 = vmatpush1.msra.mxu0 0.0
    %1013 = vmatprep.subr.mxu0 0.0
    %1014 = vmatpush1.msra.mxu0 0.0
    %1015 = vmatprep.mubr.f32.mxu0 0.0
    %1016 = vmatmul.mubr.f32.gmra.mrb[0].mxu0 %v949
    %v1017 = vpop.f32.mrb[0].mxu0
    %v1018 = vadd.f32 %v226, %v1017
    %v1019 = vpop.f32.mrb[0].mxu0
    %1020 = vdwg.mxu0
    %v1021 = vxor.u32 %v1018, 2147483648
    %v1022 = vmul.f32 %v1021, 1.442695
    %v1023 = vpow.pop %v1022
    %v1024 = vadd.f32 %v1023, 1.0
    %v1025 = vrcp.pop %v1024
    %v1026 = vmul.f32 1.0, %v1025
    %v1027 = vld [vmem:[%s1 + $0xe] sm:$0x3]
    %vm1028 = vcmp.lt.f32.partialorder %v1027, 0.5
    %v1029 = vadd.f32 %v1026, %v866
    %v1030 = vmul.f32 %v1029, 0.5
    %v1031 = vsel %vm1028, %v1030, %v866
    %vm1032 = vcmask 263168
    %1033 = vst.msk [vmem:[#allocation2] sm:$0x3] %vm1032, %v1031
    %v1034 = vmax.f32 %v1031, 1.1920929e-07
    %v1035 = vmin.f32 %v1034, 0.9999999
    %v1036 = vlog2.pop %v1035
    %v1037 = vmul.f32 %v1036, 0.6931472
    %v1038 = vsub.f32 0.0, %v1035
    %v1039 = vadd.f32 %v1038, 1.0
    %v1040 = vlog2.pop %v1039
    %v1041 = vmul.f32 %v1040, 0.6931472
    %v1042 = vmul.f32 -0.5, %v1038
    %v1043 = vadd.f32 %v1042, 1.0
    %v1044 = vmul.f32 %v1043, %v1038
    %v1045 = vand.u32 2147483647, %v1038
    %vm1046 = vcmp.lt.f32.partialorder %v1045, 0.0004427343
    %v1047 = vsel %vm1046, %v1044, %v1041
    %v1048 = vld [vmem:[%s1 + $0x10] sm:$0xff]
    %v1049 = vld [vmem:[%s1 + $0x20] sm:$0xff]
    %v1050 = vlaneseq
    %v1051 = vshrl.u32 %v1050, 7
    %v1052 = vsub.s32 0, %v1051
    %v1053 = vrot.slane %v1031, %v1052
    %vm1054 = vcmp.lt.f32.partialorder %v1048, %v1053
    %v1055 = vsel %vm1054, 1, 0
    %v1056 = vcvt.s32.f32 %v1055
    %v1058 = vsel %vm118, %v1056, 0
    %1060 = vmatprep.subr.mxu0 0.0
    %1061 = vmatpush1.msra.mxu0 %v19
    %1062 = vmatprep.subr.mxu0 0.0
    %1063 = vmatpush1.msra.mxu0 %v20
    %1064 = vmatprep.subr.mxu0 0.0
    %1065 = vmatpush1.msra.mxu0 %v21
    %1066 = vmatprep.subr.mxu0 0.0
    %1067 = vmatpush1.msra.mxu0 %v22
    %1068 = vmatprep.subr.mxu0 0.0
    %1069 = vmatpush1.msra.mxu0 %v123
    %1070 = vmatprep.subr.mxu0 0.0
    %1071 = vmatpush1.msra.mxu0 0.0
    %1072 = vmatprep.subr.mxu0 0.0
    %1073 = vmatpush1.msra.mxu0 0.0
    %1074 = vmatprep.subr.mxu0 0.0
    %1075 = vmatpush1.msra.mxu0 0.0
    %1076 = vmatprep.subr.mxu0 0.0
    %1077 = vmatpush1.msra.mxu0 0.0
    %1078 = vmatprep.subr.mxu0 0.0
    %1079 = vmatpush1.msra.mxu0 0.0
    %1080 = vmatprep.subr.mxu0 0.0
    %1081 = vmatpush1.msra.mxu0 0.0
    %1082 = vmatprep.subr.mxu0 0.0
    %1083 = vmatpush1.msra.mxu0 0.0
    %1084 = vmatprep.subr.mxu0 0.0
    %1085 = vmatpush1.msra.mxu0 0.0
    %1086 = vmatprep.subr.mxu0 0.0
    %1087 = vmatpush1.msra.mxu0 0.0
    %1088 = vmatprep.subr.mxu0 0.0
    %1089 = vmatpush1.msra.mxu0 0.0
    %1090 = vmatprep.subr.mxu0 0.0
    %1091 = vmatpush1.msra.mxu0 0.0
    %1092 = vmatprep.subr.mxu0 0.0
    %1093 = vmatpush1.msra.mxu0 0.0
    %1094 = vmatprep.subr.mxu0 0.0
    %1095 = vmatpush1.msra.mxu0 0.0
    %1096 = vmatprep.subr.mxu0 0.0
    %1097 = vmatpush1.msra.mxu0 0.0
    %1098 = vmatprep.subr.mxu0 0.0
    %1099 = vmatpush1.msra.mxu0 0.0
    %1100 = vmatprep.subr.mxu0 0.0
    %1101 = vmatpush1.msra.mxu0 0.0
    %1102 = vmatprep.subr.mxu0 0.0
    %1103 = vmatpush1.msra.mxu0 0.0
    %1104 = vmatprep.subr.mxu0 0.0
    %1105 = vmatpush1.msra.mxu0 0.0
    %1106 = vmatprep.subr.mxu0 0.0
    %1107 = vmatpush1.msra.mxu0 0.0
    %1108 = vmatprep.subr.mxu0 0.0
    %1109 = vmatpush1.msra.mxu0 0.0
    %1110 = vmatprep.subr.mxu0 0.0
    %1111 = vmatpush1.msra.mxu0 0.0
    %1112 = vmatprep.subr.mxu0 0.0
    %1113 = vmatpush1.msra.mxu0 0.0
    %1114 = vmatprep.subr.mxu0 0.0
    %1115 = vmatpush1.msra.mxu0 0.0
    %1116 = vmatprep.subr.mxu0 0.0
    %1117 = vmatpush1.msra.mxu0 0.0
    %1118 = vmatprep.subr.mxu0 0.0
    %1119 = vmatpush1.msra.mxu0 0.0
    %1120 = vmatprep.subr.mxu0 0.0
    %1121 = vmatpush1.msra.mxu0 0.0
    %1122 = vmatprep.subr.mxu0 0.0
    %1123 = vmatpush1.msra.mxu0 0.0
    %1124 = vmatprep.mubr.f32.mxu0 0.0
    %1125 = vmatmul.mubr.f32.gmra.mrb[0].mxu0 %v1058
    %v1126 = vpop.f32.mrb[0].mxu0
    %v1127 = vadd.f32 %v117, %v1126
    %v1128 = vpop.f32.mrb[0].mxu0
    %1129 = vdwg.mxu0
    %v1130 = vxor.u32 %v1127, 2147483648
    %v1131 = vmul.f32 %v1130, 1.442695
    %v1132 = vpow.pop %v1131
    %v1133 = vadd.f32 %v1132, 1.0
    %v1134 = vrcp.pop %v1133
    %v1135 = vmul.f32 1.0, %v1134
    %vm1136 = vcmp.lt.f32.partialorder %v1049, %v1135
    %v1137 = vsel %vm1136, 1, 0
    %v1138 = vcvt.s32.f32 %v1137
    %v1140 = vsel %vm34, %v1138, 0
    %1142 = vmatprep.subr.mxu0 0.0
    %1143 = vmatpush1.msra.mxu0 %v15
    %1144 = vmatprep.subr.mxu0 0.0
    %1145 = vmatpush1.msra.mxu0 %v16
    %1146 = vmatprep.subr.mxu0 0.0
    %1147 = vmatpush1.msra.mxu0 %v17
    %1148 = vmatprep.subr.mxu0 0.0
    %1149 = vmatpush1.msra.mxu0 %v18
    %1150 = vmatprep.subr.mxu0 0.0
    %1151 = vmatpush1.msra.mxu0 0.0
    %1152 = vmatprep.subr.mxu0 0.0
    %1153 = vmatpush1.msra.mxu0 0.0
    %1154 = vmatprep.subr.mxu0 0.0
    %1155 = vmatpush1.msra.mxu0 0.0
    %1156 = vmatprep.subr.mxu0 0.0
    %1157 = vmatpush1.msra.mxu0 0.0
    %1158 = vmatprep.subr.mxu0 0.0
    %1159 = vmatpush1.msra.mxu0 0.0
    %1160 = vmatprep.subr.mxu0 0.0
    %1161 = vmatpush1.msra.mxu0 0.0
    %1162 = vmatprep.subr.mxu0 0.0
    %1163 = vmatpush1.msra.mxu0 0.0
    %1164 = vmatprep.subr.mxu0 0.0
    %1165 = vmatpush1.msra.mxu0 0.0
    %1166 = vmatprep.subr.mxu0 0.0
    %1167 = vmatpush1.msra.mxu0 0.0
    %1168 = vmatprep.subr.mxu0 0.0
    %1169 = vmatpush1.msra.mxu0 0.0
    %1170 = vmatprep.subr.mxu0 0.0
    %1171 = vmatpush1.msra.mxu0 0.0
    %1172 = vmatprep.subr.mxu0 0.0
    %1173 = vmatpush1.msra.mxu0 0.0
    %1174 = vmatprep.subr.mxu0 0.0
    %1175 = vmatpush1.msra.mxu0 0.0
    %1176 = vmatprep.subr.mxu0 0.0
    %1177 = vmatpush1.msra.mxu0 0.0
    %1178 = vmatprep.subr.mxu0 0.0
    %1179 = vmatpush1.msra.mxu0 0.0
    %1180 = vmatprep.subr.mxu0 0.0
    %1181 = vmatpush1.msra.mxu0 0.0
    %1182 = vmatprep.subr.mxu0 0.0
    %1183 = vmatpush1.msra.mxu0 0.0
    %1184 = vmatprep.subr.mxu0 0.0
    %1185 = vmatpush1.msra.mxu0 0.0
    %1186 = vmatprep.subr.mxu0 0.0
    %1187 = vmatpush1.msra.mxu0 0.0
    %1188 = vmatprep.subr.mxu0 0.0
    %1189 = vmatpush1.msra.mxu0 0.0
    %1190 = vmatprep.subr.mxu0 0.0
    %1191 = vmatpush1.msra.mxu0 0.0
    %1192 = vmatprep.subr.mxu0 0.0
    %1193 = vmatpush1.msra.mxu0 0.0
    %1194 = vmatprep.subr.mxu0 0.0
    %1195 = vmatpush1.msra.mxu0 0.0
    %1196 = vmatprep.subr.mxu0 0.0
    %1197 = vmatpush1.msra.mxu0 0.0
    %1198 = vmatprep.subr.mxu0 0.0
    %1199 = vmatpush1.msra.mxu0 0.0
    %1200 = vmatprep.subr.mxu0 0.0
    %1201 = vmatpush1.msra.mxu0 0.0
    %1202 = vmatprep.subr.mxu0 0.0
    %1203 = vmatpush1.msra.mxu0 0.0
    %1204 = vmatprep.subr.mxu0 0.0
    %1205 = vmatpush1.msra.mxu0 0.0
    %1206 = vmatprep.mubr.f32.mxu0 0.0
    %1207 = vmatmul.mubr.f32.gmra.mrb[0].mxu0 %v1140
    %v1208 = vpop.f32.mrb[0].mxu0
    %v1209 = vadd.f32 0.0, %v1208
    %v1210 = vpop.f32.mrb[0].mxu0
    %1211 = vdwg.mxu0
    %v1212 = vld [vmem:[%s0 + $0x6f] sm:$0x1]
    %v1213 = vlaneseq
    %v1214 = vshrl.u32 %v1213, 7
    %v1215 = vsub.s32 0, %v1214
    %v1216 = vrot.slane %v32, %v1215
    %v1217 = vmul.f32 %v1138, %v1216
    %v1218 = vsel %vm34, %v1217, 0.0
    %1219 = vadd.xlane.f32.xlu0 %v1218
    %v1220 = vpop.xlane.xlu0 %1219
    %v1221 = vmul.f32 %v1220, 2.0
    %v1222 = vlaneseq
    %v1223 = vshrl.u32 %v1222, 7
    %v1224 = vsub.s32 0, %v1223
    %v1225 = vrot.slane %v1212, %v1224
    %v1226 = vsub.f32 %v1225, %v1221
    %v1227 = vmul.f32 %v1138, %v1209
    %v1228 = vsel %vm34, %v1227, 0.0
    %1229 = vadd.xlane.f32.xlu0 %v1228
    %v1230 = vpop.xlane.xlu0 %1229
    %v1231 = vadd.f32 %v1226, %v1230
    %v1232 = vmul.f32 %v33, -0.5
    %v1233 = vlaneseq
    %v1234 = vshrl.u32 %v1233, 7
    %v1235 = vsub.s32 0, %v1234
    %v1236 = vrot.slane %v1232, %v1235
    %1238 = vrot.lane.b32.xlu0 %v1231, 1
    %v1239 = vpop.permute.xlu0 %1238
    %v1241 = vmul.f32 %v1236, %v1239
    %v1242 = vlaneseq
    %v1243 = vshrl.u32 %v1242, 7
    %v1244 = vsub.s32 0, %v1243
    %v1245 = vrot.slane %v33, %v1244
    %1247 = vrot.lane.b32.xlu0 %v1245, 127
    %v1248 = vpop.permute.xlu0 %1247
    %v1250 = vadd.f32 %v1241, %v1248
    %v1251 = vlaneseq
    %v1252 = vshrl.u32 %v1251, 7
    %v1253 = vsub.s32 0, %v1252
    %v1254 = vrot.slane %v29, %v1253
    %v1255 = vmul.f32 %v1056, %v1254
    %v1256 = vlaneseq
    %v1257 = vshrl.u32 %v1256, 7
    %v1258 = vsub.s32 0, %v1257
    %v1259 = vrot.slane %v31, %v1258
    %v1260 = vsub.f32 %v1255, %v1259
    %vm1261 = vcmp.gt.f32.partialorder %v1056, 0.5
    %v1262 = vlaneseq
    %v1263 = vshrl.u32 %v1262, 7
    %v1264 = vsub.s32 0, %v1263
    %v1265 = vrot.slane %v1037, %v1264
    %v1266 = vlaneseq
    %v1267 = vshrl.u32 %v1266, 7
    %v1268 = vsub.s32 0, %v1267
    %v1269 = vrot.slane %v1047, %v1268
    %v1270 = vsel %vm1261, %v1265, %v1269
    %v1271 = vsub.f32 %v1260, %v1270
    %v1272 = vsel %vm118, %v1271, 0.0
    %1273 = vadd.xlane.f32.xlu0 %v1272
    %v1274 = vpop.xlane.xlu0 %1273
    %v1275 = vadd.f32 %v1250, %v1274
    %vm1276 = vcmask 15368
    %v1277 = vsel %vm1276, %v1275, -inf
    %v1278 = vrot.slane %v1277, 4
    %v1279 = vmax.f32 %v1277, %v1278
    %v1280 = vrot.slane %v1279, 2
    %v1281 = vmax.f32 %v1279, %v1280
    %v1282 = vrot.slane %v1281, 1
    %v1283 = vmax.f32 %v1281, %v1282
    %v1284 = vsub.f32 %v1275, %v1283
    %v1285 = vmul.f32 %v1284, 1.442695
    %v1286 = vpow.pop %v1285
    %v1287 = vsel %vm1276, %v1286, 0.0
    %v1288 = vrot.slane %v1287, 4
    %v1289 = vadd.f32 %v1287, %v1288
    %v1290 = vrot.slane %v1289, 2
    %v1291 = vadd.f32 %v1289, %v1290
    %v1292 = vrot.slane %v1291, 1
    %v1293 = vadd.f32 %v1291, %v1292
    %v1294 = vadd.f32 %v1283, 0.0
    %v1295 = vlog2.pop %v1293
    %v1296 = vmul.f32 %v1295, 0.6931472
    %v1297 = vadd.f32 %v1294, %v1296
    %v1298 = vld [vmem:[%s1 + $0x18] sm:$0xff]
    %v1299 = vld [vmem:[%s1 + $0x28] sm:$0xff]
    %v1300 = vlaneseq
    %v1301 = vshrl.u32 %v1300, 7
    %v1302 = vsub.s32 1, %v1301
    %v1303 = vrot.slane %v1031, %v1302
    %vm1304 = vcmp.lt.f32.partialorder %v1298, %v1303
    %v1305 = vsel %vm1304, 1, 0
    %v1306 = vcvt.s32.f32 %v1305
    %v1308 = vsel %vm118, %v1306, 0
    %1310 = vmatprep.subr.mxu0 0.0
    %1311 = vmatpush1.msra.mxu0 %v19
    %1312 = vmatprep.subr.mxu0 0.0
    %1313 = vmatpush1.msra.mxu0 %v20
    %1314 = vmatprep.subr.mxu0 0.0
    %1315 = vmatpush1.msra.mxu0 %v21
    %1316 = vmatprep.subr.mxu0 0.0
    %1317 = vmatpush1.msra.mxu0 %v22
    %1318 = vmatprep.subr.mxu0 0.0
    %1319 = vmatpush1.msra.mxu0 %v123
    %1320 = vmatprep.subr.mxu0 0.0
    %1321 = vmatpush1.msra.mxu0 0.0
    %1322 = vmatprep.subr.mxu0 0.0
    %1323 = vmatpush1.msra.mxu0 0.0
    %1324 = vmatprep.subr.mxu0 0.0
    %1325 = vmatpush1.msra.mxu0 0.0
    %1326 = vmatprep.subr.mxu0 0.0
    %1327 = vmatpush1.msra.mxu0 0.0
    %1328 = vmatprep.subr.mxu0 0.0
    %1329 = vmatpush1.msra.mxu0 0.0
    %1330 = vmatprep.subr.mxu0 0.0
    %1331 = vmatpush1.msra.mxu0 0.0
    %1332 = vmatprep.subr.mxu0 0.0
    %1333 = vmatpush1.msra.mxu0 0.0
    %1334 = vmatprep.subr.mxu0 0.0
    %1335 = vmatpush1.msra.mxu0 0.0
    %1336 = vmatprep.subr.mxu0 0.0
    %1337 = vmatpush1.msra.mxu0 0.0
    %1338 = vmatprep.subr.mxu0 0.0
    %1339 = vmatpush1.msra.mxu0 0.0
    %1340 = vmatprep.subr.mxu0 0.0
    %1341 = vmatpush1.msra.mxu0 0.0
    %1342 = vmatprep.subr.mxu0 0.0
    %1343 = vmatpush1.msra.mxu0 0.0
    %1344 = vmatprep.subr.mxu0 0.0
    %1345 = vmatpush1.msra.mxu0 0.0
    %1346 = vmatprep.subr.mxu0 0.0
    %1347 = vmatpush1.msra.mxu0 0.0
    %1348 = vmatprep.subr.mxu0 0.0
    %1349 = vmatpush1.msra.mxu0 0.0
    %1350 = vmatprep.subr.mxu0 0.0
    %1351 = vmatpush1.msra.mxu0 0.0
    %1352 = vmatprep.subr.mxu0 0.0
    %1353 = vmatpush1.msra.mxu0 0.0
    %1354 = vmatprep.subr.mxu0 0.0
    %1355 = vmatpush1.msra.mxu0 0.0
    %1356 = vmatprep.subr.mxu0 0.0
    %1357 = vmatpush1.msra.mxu0 0.0
    %1358 = vmatprep.subr.mxu0 0.0
    %1359 = vmatpush1.msra.mxu0 0.0
    %1360 = vmatprep.subr.mxu0 0.0
    %1361 = vmatpush1.msra.mxu0 0.0
    %1362 = vmatprep.subr.mxu0 0.0
    %1363 = vmatpush1.msra.mxu0 0.0
    %1364 = vmatprep.subr.mxu0 0.0
    %1365 = vmatpush1.msra.mxu0 0.0
    %1366 = vmatprep.subr.mxu0 0.0
    %1367 = vmatpush1.msra.mxu0 0.0
    %1368 = vmatprep.subr.mxu0 0.0
    %1369 = vmatpush1.msra.mxu0 0.0
    %1370 = vmatprep.subr.mxu0 0.0
    %1371 = vmatpush1.msra.mxu0 0.0
    %1372 = vmatprep.subr.mxu0 0.0
    %1373 = vmatpush1.msra.mxu0 0.0
    %1374 = vmatprep.mubr.f32.mxu0 0.0
    %1375 = vmatmul.mubr.f32.gmra.mrb[0].mxu0 %v1308
    %v1376 = vpop.f32.mrb[0].mxu0
    %v1377 = vadd.f32 %v117, %v1376
    %v1378 = vpop.f32.mrb[0].mxu0
    %1379 = vdwg.mxu0
    %v1380 = vxor.u32 %v1377, 2147483648
    %v1381 = vmul.f32 %v1380, 1.442695
    %v1382 = vpow.pop %v1381
    %v1383 = vadd.f32 %v1382, 1.0
    %v1384 = vrcp.pop %v1383
    %v1385 = vmul.f32 1.0, %v1384
    %vm1386 = vcmp.lt.f32.partialorder %v1299, %v1385
    %v1387 = vsel %vm1386, 1, 0
    %v1388 = vcvt.s32.f32 %v1387
    %v1390 = vsel %vm34, %v1388, 0
    %1392 = vmatprep.subr.mxu0 0.0
    %1393 = vmatpush1.msra.mxu0 %v15
    %1394 = vmatprep.subr.mxu0 0.0
    %1395 = vmatpush1.msra.mxu0 %v16
    %1396 = vmatprep.subr.mxu0 0.0
    %1397 = vmatpush1.msra.mxu0 %v17
    %1398 = vmatprep.subr.mxu0 0.0
    %1399 = vmatpush1.msra.mxu0 %v18
    %1400 = vmatprep.subr.mxu0 0.0
    %1401 = vmatpush1.msra.mxu0 0.0
    %1402 = vmatprep.subr.mxu0 0.0
    %1403 = vmatpush1.msra.mxu0 0.0
    %1404 = vmatprep.subr.mxu0 0.0
    %1405 = vmatpush1.msra.mxu0 0.0
    %1406 = vmatprep.subr.mxu0 0.0
    %1407 = vmatpush1.msra.mxu0 0.0
    %1408 = vmatprep.subr.mxu0 0.0
    %1409 = vmatpush1.msra.mxu0 0.0
    %1410 = vmatprep.subr.mxu0 0.0
    %1411 = vmatpush1.msra.mxu0 0.0
    %1412 = vmatprep.subr.mxu0 0.0
    %1413 = vmatpush1.msra.mxu0 0.0
    %1414 = vmatprep.subr.mxu0 0.0
    %1415 = vmatpush1.msra.mxu0 0.0
    %1416 = vmatprep.subr.mxu0 0.0
    %1417 = vmatpush1.msra.mxu0 0.0
    %1418 = vmatprep.subr.mxu0 0.0
    %1419 = vmatpush1.msra.mxu0 0.0
    %1420 = vmatprep.subr.mxu0 0.0
    %1421 = vmatpush1.msra.mxu0 0.0
    %1422 = vmatprep.subr.mxu0 0.0
    %1423 = vmatpush1.msra.mxu0 0.0
    %1424 = vmatprep.subr.mxu0 0.0
    %1425 = vmatpush1.msra.mxu0 0.0
    %1426 = vmatprep.subr.mxu0 0.0
    %1427 = vmatpush1.msra.mxu0 0.0
    %1428 = vmatprep.subr.mxu0 0.0
    %1429 = vmatpush1.msra.mxu0 0.0
    %1430 = vmatprep.subr.mxu0 0.0
    %1431 = vmatpush1.msra.mxu0 0.0
    %1432 = vmatprep.subr.mxu0 0.0
    %1433 = vmatpush1.msra.mxu0 0.0
    %1434 = vmatprep.subr.mxu0 0.0
    %1435 = vmatpush1.msra.mxu0 0.0
    %1436 = vmatprep.subr.mxu0 0.0
    %1437 = vmatpush1.msra.mxu0 0.0
    %1438 = vmatprep.subr.mxu0 0.0
    %1439 = vmatpush1.msra.mxu0 0.0
    %1440 = vmatprep.subr.mxu0 0.0
    %1441 = vmatpush1.msra.mxu0 0.0
    %1442 = vmatprep.subr.mxu0 0.0
    %1443 = vmatpush1.msra.mxu0 0.0
    %1444 = vmatprep.subr.mxu0 0.0
    %1445 = vmatpush1.msra.mxu0 0.0
    %1446 = vmatprep.subr.mxu0 0.0
    %1447 = vmatpush1.msra.mxu0 0.0
    %1448 = vmatprep.subr.mxu0 0.0
    %1449 = vmatpush1.msra.mxu0 0.0
    %1450 = vmatprep.subr.mxu0 0.0
    %1451 = vmatpush1.msra.mxu0 0.0
    %1452 = vmatprep.subr.mxu0 0.0
    %1453 = vmatpush1.msra.mxu0 0.0
    %1454 = vmatprep.subr.mxu0 0.0
    %1455 = vmatpush1.msra.mxu0 0.0
    %1456 = vmatprep.mubr.f32.mxu0 0.0
    %1457 = vmatmul.mubr.f32.gmra.mrb[0].mxu0 %v1390
    %v1458 = vpop.f32.mrb[0].mxu0
    %v1459 = vadd.f32 0.0, %v1458
    %v1460 = vpop.f32.mrb[0].mxu0
    %1461 = vdwg.mxu0
    %v1462 = vlaneseq
    %v1463 = vshrl.u32 %v1462, 7
    %v1464 = vsub.s32 1, %v1463
    %v1465 = vrot.slane %v32, %v1464
    %v1466 = vmul.f32 %v1388, %v1465
    %v1467 = vsel %vm34, %v1466, 0.0
    %1468 = vadd.xlane.f32.xlu0 %v1467
    %v1469 = vpop.xlane.xlu0 %1468
    %v1470 = vmul.f32 %v1469, 2.0
    %v1471 = vsub.f32 %v1225, %v1470
    %v1472 = vmul.f32 %v1388, %v1459
    %v1473 = vsel %vm34, %v1472, 0.0
    %1474 = vadd.xlane.f32.xlu0 %v1473
    %v1475 = vpop.xlane.xlu0 %1474
    %v1476 = vadd.f32 %v1471, %v1475
    %v1477 = vmul.f32 %v1236, %v1476
    %v1478 = vadd.f32 %v1477, %v1248
    %v1479 = vmul.f32 %v1306, %v1254
    %v1480 = vsub.f32 %v1479, %v1259
    %vm1481 = vcmp.gt.f32.partialorder %v1306, 0.5
    %v1482 = vlaneseq
    %v1483 = vshrl.u32 %v1482, 7
    %v1484 = vsub.s32 1, %v1483
    %v1485 = vrot.slane %v1037, %v1484
    %v1486 = vlaneseq
    %v1487 = vshrl.u32 %v1486, 7
    %v1488 = vsub.s32 1, %v1487
    %v1489 = vrot.slane %v1047, %v1488
    %v1490 = vsel %vm1481, %v1485, %v1489
    %v1491 = vsub.f32 %v1480, %v1490
    %v1492 = vsel %vm118, %v1491, 0.0
    %1493 = vadd.xlane.f32.xlu0 %v1492
    %v1494 = vpop.xlane.xlu0 %1493
    %v1495 = vadd.f32 %v1478, %v1494
    %v1496 = vsel %vm1276, %v1495, -inf
    %v1497 = vrot.slane %v1496, 4
    %v1498 = vmax.f32 %v1496, %v1497
    %v1499 = vrot.slane %v1498, 2
    %v1500 = vmax.f32 %v1498, %v1499
    %v1501 = vrot.slane %v1500, 1
    %v1502 = vmax.f32 %v1500, %v1501
    %v1503 = vsub.f32 %v1495, %v1502
    %v1504 = vmul.f32 %v1503, 1.442695
    %v1505 = vpow.pop %v1504
    %v1506 = vsel %vm1276, %v1505, 0.0
    %v1507 = vrot.slane %v1506, 4
    %v1508 = vadd.f32 %v1506, %v1507
    %v1509 = vrot.slane %v1508, 2
    %v1510 = vadd.f32 %v1508, %v1509
    %v1511 = vrot.slane %v1510, 1
    %v1512 = vadd.f32 %v1510, %v1511
    %v1513 = vadd.f32 %v1297, %v1502
    %v1514 = vlog2.pop %v1512
    %v1515 = vmul.f32 %v1514, 0.6931472
    %v1516 = vadd.f32 %v1513, %v1515
    %v1517 = vmul.f32 %v1516, 0.5
    %v1518 = vsub.f32 2.0794415, %v1517
    %1520 = vrot.lane.b32.xlu0 %v1518, 127
    %v1521 = vpop.permute.xlu0 %1520
    %vm1523 = vcmask 0
    %1524 = vst.msk [vmem:[#allocation4] sm:$0x1] %vm1523, %v1521
    // Predicated region
    $region10: #{srbmgl2_loss.1} parent=1 // pred_check
      _
    $region11: #{srbmgl2_loss.1} parent=1 // pred_check_branch
      %1526 = sbr.rel (0) target = $region13
    $region12: #{srbmgl2_loss.1} parent=1 // pred_region
      %s1528 = ssub.s32 32, 32
      %1529 = vsyncadd [#allocation3], %s1528
      %s1531 = sshll.u32 [#allocation2], 4
      %s1532 = int_to_ptr.vmem [resolvable:$true] %s1531
      %1534 = dma.vmem_to_hbm [thread:$0]  %s1532, 32, %s2, [#allocation3]
    $region13: #{srbmgl2_loss.1} parent=1 // pred_fallthru
      _
    // Predicated region
    $region14: #{srbmgl2_loss.1} parent=1 // pred_check
      _
    $region15: #{srbmgl2_loss.1} parent=1 // pred_check_branch
      %1536 = sbr.rel (0) target = $region17
    $region16: #{srbmgl2_loss.1} parent=1 // pred_region
      %s1538 = ssub.s32 16, 16
      %1539 = vsyncadd [#allocation5], %s1538
      %s1541 = sshll.u32 [#allocation4], 4
      %s1542 = int_to_ptr.vmem [resolvable:$true] %s1541
      %1544 = dma.vmem_to_hbm [thread:$0]  %s1542, 16, %s3, [#allocation5]
    $region17: #{srbmgl2_loss.1} parent=1 // pred_fallthru
      _
    // Predicated region
    $region18: #{srbmgl2_loss.1} parent=1 // pred_check
      _
    $region19: #{srbmgl2_loss.1} parent=1 // pred_check_branch
      %1546 = sbr.rel (0) target = $region21
    $region20: #{srbmgl2_loss.1} parent=1 // pred_region
      %1547 = dma.done [#allocation3], 32
    $region21: #{srbmgl2_loss.1} parent=1 // pred_fallthru
      _
    // Predicated region
    $region22: #{srbmgl2_loss.1} parent=1 // pred_check
      _
    $region23: #{srbmgl2_loss.1} parent=1 // pred_check_branch
      %1549 = sbr.rel (0) target = $region25
    $region24: #{srbmgl2_loss.1} parent=1 // pred_region
      %1550 = dma.done [#allocation5], 16
    $region25: #{srbmgl2_loss.1} parent=1 // pred_fallthru
      _
    %1551 = vsyncpa [#allocation3], 1
    %1552 = vsyncpa [#allocation5], 1

</llo_original>
